<compile_context>
chip_gen: v7x
topology: tpu7x:2x2x1
jax: 0.10.0
libtpu: 0.0.40
codegen_flags: <defaults>
</compile_context>

<pallas_src>
import jax
import jax.numpy as jnp
from jax.experimental import pallas as pl
from jax.experimental.pallas import tpu as pltpu

_LANE = 128
_SUB = 8


def _lstm_kernel(x_ref, h0_ref, c0_ref, wih_t_ref, whh_t_ref, b_ref,
                 wout_t_ref, bout_ref,
                 pred_ref, hout_ref, cout_ref,
                 prex_s, hseq_s):
    seq, bb, _ = x_ref.shape
    nhp = h0_ref.shape[-1]                       # lane-padded hidden width (mult of 128)
    nop = pred_ref.shape[-1]                     # lane-padded output width

    # ---- Hoisted input projection for ALL timesteps (one MXU matmul). ----
    x2d = x_ref[...].reshape(seq * bb, x_ref.shape[-1])
    prex_s[...] = (jnp.dot(x2d, wih_t_ref[...],
                           preferred_element_type=jnp.float32)
                   + b_ref[...])                 # b = b_ih + b_hh, shape (1, 4*nhp)

    whh_t = whh_t_ref[...]                       # (nhp, 4*nhp), loaded once

    def _sigmoid(v):
        # EUP tanh instead of a VALU divide chain.
        return 0.5 * jnp.tanh(0.5 * v) + 0.5

    # ---- Serial recurrence: only h @ W_hh^T + gating stays on the critical path. ----
    def step(t, carry):
        h, c = carry
        row = pl.multiple_of(t * bb, bb)         # bb is a multiple of 8 -> aligned slice
        gates = prex_s[pl.ds(row, bb), :] + jnp.dot(
            h, whh_t, preferred_element_type=jnp.float32)      # (bb, 4*nhp)
        # Each slice below is a lane-aligned 128-wide slab (nhp % 128 == 0).
        i = _sigmoid(gates[:, 0 * nhp:1 * nhp])
        f = _sigmoid(gates[:, 1 * nhp:2 * nhp])
        g = jnp.tanh(gates[:, 2 * nhp:3 * nhp])
        o = _sigmoid(gates[:, 3 * nhp:4 * nhp])
        c_new = f * c + i * g
        h_new = o * jnp.tanh(c_new)
        hseq_s[pl.ds(row, bb), :] = h_new        # dense 128-lane store
        return (h_new, c_new)

    h0 = h0_ref[...].astype(jnp.float32)
    c0 = c0_ref[...].astype(jnp.float32)
    unroll = True if seq <= 16 else 8            # partial unroll for long sequences
    h_last, c_last = jax.lax.fori_loop(0, seq, step, (h0, c0), unroll=unroll)

    # ---- Hoisted output projection: one lane-dense matmul + bias, one dense store. ----
    pred2d = (jnp.dot(hseq_s[...], wout_t_ref[...],
                      preferred_element_type=jnp.float32)
              + bout_ref[...])
    pred_ref[...] = pred2d.reshape(seq, bb, nop).astype(pred_ref.dtype)
    hout_ref[...] = h_last.astype(hout_ref.dtype)
    cout_ref[...] = c_last.astype(cout_ref.dtype)


def _pad_axis(a, axis, new_size):
    pad = new_size - a.shape[axis]
    if pad <= 0:
        return a
    cfg = [(0, 0)] * a.ndim
    cfg[axis] = (0, pad)
    return jnp.pad(a, cfg)


def lstm_periodic_forward(X, H, c, params, *, batch_block=None):
    """X: (seq, batch, num_inputs), H/c: (1, batch, num_hiddens).
    Returns (pred, (H_final, c_final)) matching torch LSTM_periodic.forward."""
    seq, batch, num_inputs = X.shape
    nh = H.shape[-1]
    w_ih, w_hh = params["w_ih"], params["w_hh"]
    b_ih, b_hh = params["b_ih"], params["b_hh"]
    w_out, b_out = params["w_out"], params["b_out"]
    num_out = w_out.shape[0]

    # Lane/sublane padding (all layout plumbing lives in the wrapper).
    nhp = ((nh + _LANE - 1) // _LANE) * _LANE
    nop = ((num_out + _LANE - 1) // _LANE) * _LANE
    b_pad = ((batch + _SUB - 1) // _SUB) * _SUB
    if batch_block is None:
        batch_block = b_pad                       # grid=(1,); set smaller (mult of 8) to
    assert batch_block % _SUB == 0                # split batch across v7x TensorCores.
    assert b_pad % batch_block == 0
    n_blocks = b_pad // batch_block

    # Pad batch of the runtime tensors.
    Xp = _pad_axis(X, 1, b_pad)                               # (seq, b_pad, ni)
    h0 = _pad_axis(_pad_axis(H[0], 0, b_pad), 1, nhp)         # (b_pad, nhp)
    c0 = _pad_axis(_pad_axis(c[0], 0, b_pad), 1, nhp)

    # Per-gate lane padding of the LSTM weights (gate order i, f, g, o).
    wih_g = _pad_axis(w_ih.reshape(4, nh, num_inputs), 1, nhp)     # (4, nhp, ni)
    whh_g = _pad_axis(_pad_axis(w_hh.reshape(4, nh, nh), 1, nhp), 2, nhp)
    bias_g = _pad_axis((b_ih + b_hh).reshape(4, nh), 1, nhp)       # (4, nhp)
    wih_t = wih_g.reshape(4 * nhp, num_inputs).T                   # (ni, 4*nhp)
    whh_t = whh_g.reshape(4 * nhp, nhp).T                          # (nhp, 4*nhp)
    bias = bias_g.reshape(1, 4 * nhp)

    # Lane-padded output projection.
    wout_t = _pad_axis(_pad_axis(w_out, 0, nop), 1, nhp).T         # (nhp, nop)
    bout = _pad_axis(b_out, 0, nop).reshape(1, nop)

    # Raise the scoped-VMEM limit only when the hoisted scratches demand it.
    f32 = 4
    scratch_bytes = seq * batch_block * (5 * nhp) * f32
    io_bytes = f32 * (2 * seq * batch_block * (num_inputs + nop)
                      + 8 * batch_block * nhp
                      + num_inputs * 4 * nhp + nhp * 4 * nhp + 4 * nhp
                      + nhp * nop + nop)
    est = scratch_bytes + io_bytes
    if est > 12 * 1024 * 1024:
        compiler_params = pltpu.CompilerParams(
            dimension_semantics=("parallel",),
            vmem_limit_bytes=min(2 * est, 100 * 1024 * 1024))
    else:
        compiler_params = pltpu.CompilerParams(dimension_semantics=("parallel",))

    pred3d, h_f, c_f = pl.pallas_call(
        _lstm_kernel,
        out_shape=(
            jax.ShapeDtypeStruct((seq, b_pad, nop), X.dtype),
            jax.ShapeDtypeStruct((b_pad, nhp), X.dtype),
            jax.ShapeDtypeStruct((b_pad, nhp), X.dtype),
        ),
        grid_spec=pltpu.PrefetchScalarGridSpec(
            num_scalar_prefetch=0,
            grid=(n_blocks,),
            in_specs=[
                pl.BlockSpec((seq, batch_block, num_inputs), lambda j: (0, j, 0)),  # X
                pl.BlockSpec((batch_block, nhp), lambda j: (j, 0)),                 # h0
                pl.BlockSpec((batch_block, nhp), lambda j: (j, 0)),                 # c0
                pl.BlockSpec((num_inputs, 4 * nhp), lambda j: (0, 0)),              # W_ih^T
                pl.BlockSpec((nhp, 4 * nhp), lambda j: (0, 0)),                     # W_hh^T
                pl.BlockSpec((1, 4 * nhp), lambda j: (0, 0)),                       # b_ih+b_hh
                pl.BlockSpec((nhp, nop), lambda j: (0, 0)),                         # W_out^T
                pl.BlockSpec((1, nop), lambda j: (0, 0)),                           # b_out
            ],
            out_specs=[
                pl.BlockSpec((seq, batch_block, nop), lambda j: (0, j, 0)),         # pred
                pl.BlockSpec((batch_block, nhp), lambda j: (j, 0)),                 # H_final
                pl.BlockSpec((batch_block, nhp), lambda j: (j, 0)),                 # c_final
            ],
            scratch_shapes=[
                pltpu.VMEM((seq * batch_block, 4 * nhp), jnp.float32),  # hoisted x-proj
                pltpu.VMEM((seq * batch_block, nhp), jnp.float32),      # all h_t states
            ],
        ),
        compiler_params=compiler_params,
    )(Xp, h0, c0, wih_t, whh_t, bias, wout_t, bout)

    pred = pred3d[:, :batch, :num_out]
    H_final = h_f[:batch, :nh][None]
    c_final = c_f[:batch, :nh][None]
    return pred, (H_final, c_final)


def _reference_forward(X, H, c, params):
    """Pure-JAX reference matching torch nn.LSTM (gate order i,f,g,o) + nn.Linear."""
    w_ih, w_hh, b_ih, b_hh = params["w_ih"], params["w_hh"], params["b_ih"], params["b_hh"]
    w_out, b_out = params["w_out"], params["b_out"]

    def step(carry, x_t):
        h, cc = carry
        gates = x_t @ w_ih.T + b_ih + h @ w_hh.T + b_hh
        i, f, g, o = jnp.split(gates, 4, axis=-1)
        i, f, o = jax.nn.sigmoid(i), jax.nn.sigmoid(f), jax.nn.sigmoid(o)
        g = jnp.tanh(g)
        cc = f * cc + i * g
        h = o * jnp.tanh(cc)
        return (h, cc), h

    (h_last, c_last), states = jax.lax.scan(step, (H[0], c[0]), X)
    pred = states @ w_out.T + b_out
    return pred, (h_last[None], c_last[None])


def init_params(key, num_inputs, num_hiddens, num_out):
    """PyTorch-style U(-1/sqrt(H), 1/sqrt(H)) init for LSTM + Linear."""
    ks = jax.random.split(key, 6)
    bound = 1.0 / jnp.sqrt(jnp.float32(num_hiddens))
    u = lambda k, shape: jax.random.uniform(k, shape, jnp.float32, -bound, bound)
    return {
        "w_ih": u(ks[0], (4 * num_hiddens, num_inputs)),
        "w_hh": u(ks[1], (4 * num_hiddens, num_hiddens)),
        "b_ih": u(ks[2], (4 * num_hiddens,)),
        "b_hh": u(ks[3], (4 * num_hiddens,)),
        "w_out": u(ks[4], (num_out, num_hiddens)),
        "b_out": u(ks[5], (num_out,)),
    }


if __name__ == "__main__":
    seq_len, batch, num_inputs, num_hiddens, num_out = 8, 8, 8, 32, 1

    key = jax.random.PRNGKey(0)
    kx, kh, kc, kp = jax.random.split(key, 4)
    X = jax.random.normal(kx, (seq_len, batch, num_inputs), jnp.float32)
    H = jax.random.normal(kh, (1, batch, num_hiddens), jnp.float32)
    c = jax.random.normal(kc, (1, batch, num_hiddens), jnp.float32)
    params = init_params(kp, num_inputs, num_hiddens, num_out)

    pred, (H_final, c_final) = lstm_periodic_forward(X, H, c, params)
    pred = jax.block_until_ready(pred)
    H_final = jax.block_until_ready(H_final)
    c_final = jax.block_until_ready(c_final)

    pred_ref, (H_ref, c_ref) = _reference_forward(X, H, c, params)
    assert pred.shape == (seq_len, batch, num_out)
    assert H_final.shape == (1, batch, num_hiddens)
    assert c_final.shape == (1, batch, num_hiddens)
    assert jnp.allclose(pred, pred_ref, atol=2e-4, rtol=2e-4)
    assert jnp.allclose(H_final, H_ref, atol=2e-4, rtol=2e-4)
    assert jnp.allclose(c_final, c_ref, atol=2e-4, rtol=2e-4)

    print("KERNEL_OK")
</pallas_src>

<mosaic_0001>
module attributes {stable_mosaic.version = 11 : i64} {
  func.func @_lstm_kernel(%arg0: i32, %arg1: memref<8x8x8xf32, #tpu.memory_space<vmem>>, %arg2: memref<8x128xf32, #tpu.memory_space<vmem>>, %arg3: memref<8x128xf32, #tpu.memory_space<vmem>>, %arg4: memref<8x512xf32, #tpu.memory_space<vmem>>, %arg5: memref<128x512xf32, #tpu.memory_space<vmem>>, %arg6: memref<1x512xf32, #tpu.memory_space<vmem>>, %arg7: memref<128x128xf32, #tpu.memory_space<vmem>>, %arg8: memref<1x128xf32, #tpu.memory_space<vmem>>, %arg9: memref<8x8x128xf32, #tpu.memory_space<vmem>>, %arg10: memref<8x128xf32, #tpu.memory_space<vmem>>, %arg11: memref<8x128xf32, #tpu.memory_space<vmem>>, %arg12: memref<64x512xf32, #tpu.memory_space<vmem>>, %arg13: memref<64x128xf32, #tpu.memory_space<vmem>>) attributes {dimension_semantics = [#tpu.dimension_semantics<parallel>], iteration_bounds = array<i64: 1>, scalar_prefetch = 0 : i64, scratch_operands = 2 : i64, tpu.core_type = #tpu.core_type<tc>, window_params = [{transform_indices = @transform_0, window_bounds = array<i64: 8, 8, 8>}, {transform_indices = @transform_1, window_bounds = array<i64: 8, 128>}, {transform_indices = @transform_2, window_bounds = array<i64: 8, 128>}, {pipeline_mode = #tpu.pipeline_mode<synchronous>, transform_indices = @transform_3, window_bounds = array<i64: 8, 512>}, {pipeline_mode = #tpu.pipeline_mode<synchronous>, transform_indices = @transform_4, window_bounds = array<i64: 128, 512>}, {pipeline_mode = #tpu.pipeline_mode<synchronous>, transform_indices = @transform_5, window_bounds = array<i64: 1, 512>}, {pipeline_mode = #tpu.pipeline_mode<synchronous>, transform_indices = @transform_6, window_bounds = array<i64: 128, 128>}, {pipeline_mode = #tpu.pipeline_mode<synchronous>, transform_indices = @transform_7, window_bounds = array<i64: 1, 128>}, {transform_indices = @transform_8, window_bounds = array<i64: 8, 8, 128>}, {transform_indices = @transform_9, window_bounds = array<i64: 8, 128>}, {transform_indices = @transform_10, window_bounds = array<i64: 8, 128>}]} {
    %c0 = arith.constant 0 : index
    %c0_0 = arith.constant 0 : index
    %c0_1 = arith.constant 0 : index
    %0 = vector.load %arg1[%c0, %c0_0, %c0_1] : memref<8x8x8xf32, #tpu.memory_space<vmem>>, vector<8x8x8xf32>
    %1 = vector.shape_cast %0 : vector<8x8x8xf32> to vector<64x8xf32>
    %c0_2 = arith.constant 0 : index
    %c0_3 = arith.constant 0 : index
    %2 = vector.load %arg4[%c0_2, %c0_3] : memref<8x512xf32, #tpu.memory_space<vmem>>, vector<8x512xf32>
    %cst = arith.constant dense<0.000000e+00> : vector<64x512xf32>
    %3 = tpu.matmul %1, %2, %cst {dimension_numbers = #tpu.dot_dimension_numbers<[1], [0], [0], [1], [0, 0, 1, 1], [], []>} : vector<64x8xf32>, vector<8x512xf32>, vector<64x512xf32> -> vector<64x512xf32>
    %c0_4 = arith.constant 0 : index
    %c0_5 = arith.constant 0 : index
    %4 = vector.load %arg6[%c0_4, %c0_5] : memref<1x512xf32, #tpu.memory_space<vmem>>, vector<1x512xf32>
    %5 = vector.broadcast %4 : vector<1x512xf32> to vector<64x512xf32>
    %6 = arith.addf %3, %5 : vector<64x512xf32>
    %c0_6 = arith.constant 0 : index
    %c0_7 = arith.constant 0 : index
    %7 = vector.load %arg12[%c0_6, %c0_7] : memref<64x512xf32, #tpu.memory_space<vmem>>, vector<64x512xf32>
    tpu.vector_store %arg12[%c0_6, %c0_7], %6 {strides = array<i32>} : memref<64x512xf32, #tpu.memory_space<vmem>>, vector<64x512xf32>,
    %c0_8 = arith.constant 0 : index
    %c0_9 = arith.constant 0 : index
    %8 = vector.load %arg5[%c0_8, %c0_9] : memref<128x512xf32, #tpu.memory_space<vmem>>, vector<128x512xf32>
    %c0_10 = arith.constant 0 : index
    %c0_11 = arith.constant 0 : index
    %9 = vector.load %arg2[%c0_10, %c0_11] : memref<8x128xf32, #tpu.memory_space<vmem>>, vector<8x128xf32>
    %c0_12 = arith.constant 0 : index
    %c0_13 = arith.constant 0 : index
    %10 = vector.load %arg3[%c0_12, %c0_13] : memref<8x128xf32, #tpu.memory_space<vmem>>, vector<8x128xf32>
    %c0_i32 = arith.constant 0 : i32
    %c8_i32 = arith.constant 8 : i32
    %11 = arith.muli %c0_i32, %c8_i32 : i32
    %12 = tpu.assume_multiple %11, 8 : i32
    %13 = arith.index_cast %12 : i32 to index
    %c0_14 = arith.constant 0 : index
    %14 = vector.load %arg12[%13, %c0_14] : memref<64x512xf32, #tpu.memory_space<vmem>>, vector<8x512xf32>
    %cst_15 = arith.constant dense<0.000000e+00> : vector<8x512xf32>
    %15 = tpu.matmul %9, %8, %cst_15 {dimension_numbers = #tpu.dot_dimension_numbers<[1], [0], [0], [1], [0, 0, 1, 1], [], []>} : vector<8x128xf32>, vector<128x512xf32>, vector<8x512xf32> -> vector<8x512xf32>
    %16 = arith.addf %14, %15 : vector<8x512xf32>
    %17 = vector.extract_strided_slice %16 {offsets = [0, 0], sizes = [8, 128], strides = [1, 1]} : vector<8x512xf32> to vector<8x128xf32>
    %cst_16 = arith.constant 5.000000e-01 : f32
    %18 = vector.broadcast %cst_16 : f32 to vector<8x128xf32>
    %19 = arith.mulf %18, %17 : vector<8x128xf32>
    %20 = math.tanh %19 : vector<8x128xf32>
    %cst_17 = arith.constant 5.000000e-01 : f32
    %21 = vector.broadcast %cst_17 : f32 to vector<8x128xf32>
    %22 = arith.mulf %21, %20 : vector<8x128xf32>
    %cst_18 = arith.constant 5.000000e-01 : f32
    %23 = vector.broadcast %cst_18 : f32 to vector<8x128xf32>
    %24 = arith.addf %22, %23 : vector<8x128xf32>
    %25 = vector.extract_strided_slice %16 {offsets = [0, 128], sizes = [8, 128], strides = [1, 1]} : vector<8x512xf32> to vector<8x128xf32>
    %cst_19 = arith.constant 5.000000e-01 : f32
    %26 = vector.broadcast %cst_19 : f32 to vector<8x128xf32>
    %27 = arith.mulf %26, %25 : vector<8x128xf32>
    %28 = math.tanh %27 : vector<8x128xf32>
    %cst_20 = arith.constant 5.000000e-01 : f32
    %29 = vector.broadcast %cst_20 : f32 to vector<8x128xf32>
    %30 = arith.mulf %29, %28 : vector<8x128xf32>
    %cst_21 = arith.constant 5.000000e-01 : f32
    %31 = vector.broadcast %cst_21 : f32 to vector<8x128xf32>
    %32 = arith.addf %30, %31 : vector<8x128xf32>
    %33 = vector.extract_strided_slice %16 {offsets = [0, 256], sizes = [8, 128], strides = [1, 1]} : vector<8x512xf32> to vector<8x128xf32>
    %34 = math.tanh %33 : vector<8x128xf32>
    %35 = vector.extract_strided_slice %16 {offsets = [0, 384], sizes = [8, 128], strides = [1, 1]} : vector<8x512xf32> to vector<8x128xf32>
    %cst_22 = arith.constant 5.000000e-01 : f32
    %36 = vector.broadcast %cst_22 : f32 to vector<8x128xf32>
    %37 = arith.mulf %36, %35 : vector<8x128xf32>
    %38 = math.tanh %37 : vector<8x128xf32>
    %cst_23 = arith.constant 5.000000e-01 : f32
    %39 = vector.broadcast %cst_23 : f32 to vector<8x128xf32>
    %40 = arith.mulf %39, %38 : vector<8x128xf32>
    %cst_24 = arith.constant 5.000000e-01 : f32
    %41 = vector.broadcast %cst_24 : f32 to vector<8x128xf32>
    %42 = arith.addf %40, %41 : vector<8x128xf32>
    %43 = arith.mulf %32, %10 : vector<8x128xf32>
    %44 = arith.mulf %24, %34 : vector<8x128xf32>
    %45 = arith.addf %43, %44 : vector<8x128xf32>
    %46 = math.tanh %45 : vector<8x128xf32>
    %47 = arith.mulf %42, %46 : vector<8x128xf32>
    %48 = arith.index_cast %12 : i32 to index
    %c0_25 = arith.constant 0 : index
    %49 = vector.load %arg13[%48, %c0_25] : memref<64x128xf32, #tpu.memory_space<vmem>>, vector<8x128xf32>
    tpu.vector_store %arg13[%48, %c0_25], %47 {strides = array<i32>} : memref<64x128xf32, #tpu.memory_space<vmem>>, vector<8x128xf32>,
    %c1_i32 = arith.constant 1 : i32
    %c8_i32_26 = arith.constant 8 : i32
    %50 = arith.muli %c1_i32, %c8_i32_26 : i32
    %51 = tpu.assume_multiple %50, 8 : i32
    %52 = arith.index_cast %51 : i32 to index
    %c0_27 = arith.constant 0 : index
    %53 = vector.load %arg12[%52, %c0_27] : memref<64x512xf32, #tpu.memory_space<vmem>>, vector<8x512xf32>
    %cst_28 = arith.constant dense<0.000000e+00> : vector<8x512xf32>
    %54 = tpu.matmul %47, %8, %cst_28 {dimension_numbers = #tpu.dot_dimension_numbers<[1], [0], [0], [1], [0, 0, 1, 1], [], []>} : vector<8x128xf32>, vector<128x512xf32>, vector<8x512xf32> -> vector<8x512xf32>
    %55 = arith.addf %53, %54 : vector<8x512xf32>
    %56 = vector.extract_strided_slice %55 {offsets = [0, 0], sizes = [8, 128], strides = [1, 1]} : vector<8x512xf32> to vector<8x128xf32>
    %cst_29 = arith.constant 5.000000e-01 : f32
    %57 = vector.broadcast %cst_29 : f32 to vector<8x128xf32>
    %58 = arith.mulf %57, %56 : vector<8x128xf32>
    %59 = math.tanh %58 : vector<8x128xf32>
    %cst_30 = arith.constant 5.000000e-01 : f32
    %60 = vector.broadcast %cst_30 : f32 to vector<8x128xf32>
    %61 = arith.mulf %60, %59 : vector<8x128xf32>
    %cst_31 = arith.constant 5.000000e-01 : f32
    %62 = vector.broadcast %cst_31 : f32 to vector<8x128xf32>
    %63 = arith.addf %61, %62 : vector<8x128xf32>
    %64 = vector.extract_strided_slice %55 {offsets = [0, 128], sizes = [8, 128], strides = [1, 1]} : vector<8x512xf32> to vector<8x128xf32>
    %cst_32 = arith.constant 5.000000e-01 : f32
    %65 = vector.broadcast %cst_32 : f32 to vector<8x128xf32>
    %66 = arith.mulf %65, %64 : vector<8x128xf32>
    %67 = math.tanh %66 : vector<8x128xf32>
    %cst_33 = arith.constant 5.000000e-01 : f32
    %68 = vector.broadcast %cst_33 : f32 to vector<8x128xf32>
    %69 = arith.mulf %68, %67 : vector<8x128xf32>
    %cst_34 = arith.constant 5.000000e-01 : f32
    %70 = vector.broadcast %cst_34 : f32 to vector<8x128xf32>
    %71 = arith.addf %69, %70 : vector<8x128xf32>
    %72 = vector.extract_strided_slice %55 {offsets = [0, 256], sizes = [8, 128], strides = [1, 1]} : vector<8x512xf32> to vector<8x128xf32>
    %73 = math.tanh %72 : vector<8x128xf32>
    %74 = vector.extract_strided_slice %55 {offsets = [0, 384], sizes = [8, 128], strides = [1, 1]} : vector<8x512xf32> to vector<8x128xf32>
    %cst_35 = arith.constant 5.000000e-01 : f32
    %75 = vector.broadcast %cst_35 : f32 to vector<8x128xf32>
    %76 = arith.mulf %75, %74 : vector<8x128xf32>
    %77 = math.tanh %76 : vector<8x128xf32>
    %cst_36 = arith.constant 5.000000e-01 : f32
    %78 = vector.broadcast %cst_36 : f32 to vector<8x128xf32>
    %79 = arith.mulf %78, %77 : vector<8x128xf32>
    %cst_37 = arith.constant 5.000000e-01 : f32
    %80 = vector.broadcast %cst_37 : f32 to vector<8x128xf32>
    %81 = arith.addf %79, %80 : vector<8x128xf32>
    %82 = arith.mulf %71, %45 : vector<8x128xf32>
    %83 = arith.mulf %63, %73 : vector<8x128xf32>
    %84 = arith.addf %82, %83 : vector<8x128xf32>
    %85 = math.tanh %84 : vector<8x128xf32>
    %86 = arith.mulf %81, %85 : vector<8x128xf32>
    %87 = arith.index_cast %51 : i32 to index
    %c0_38 = arith.constant 0 : index
    %88 = vector.load %arg13[%87, %c0_38] : memref<64x128xf32, #tpu.memory_space<vmem>>, vector<8x128xf32>
    tpu.vector_store %arg13[%87, %c0_38], %86 {strides = array<i32>} : memref<64x128xf32, #tpu.memory_space<vmem>>, vector<8x128xf32>,
    %c2_i32 = arith.constant 2 : i32
    %c8_i32_39 = arith.constant 8 : i32
    %89 = arith.muli %c2_i32, %c8_i32_39 : i32
    %90 = tpu.assume_multiple %89, 8 : i32
    %91 = arith.index_cast %90 : i32 to index
    %c0_40 = arith.constant 0 : index
    %92 = vector.load %arg12[%91, %c0_40] : memref<64x512xf32, #tpu.memory_space<vmem>>, vector<8x512xf32>
    %cst_41 = arith.constant dense<0.000000e+00> : vector<8x512xf32>
    %93 = tpu.matmul %86, %8, %cst_41 {dimension_numbers = #tpu.dot_dimension_numbers<[1], [0], [0], [1], [0, 0, 1, 1], [], []>} : vector<8x128xf32>, vector<128x512xf32>, vector<8x512xf32> -> vector<8x512xf32>
    %94 = arith.addf %92, %93 : vector<8x512xf32>
    %95 = vector.extract_strided_slice %94 {offsets = [0, 0], sizes = [8, 128], strides = [1, 1]} : vector<8x512xf32> to vector<8x128xf32>
    %cst_42 = arith.constant 5.000000e-01 : f32
    %96 = vector.broadcast %cst_42 : f32 to vector<8x128xf32>
    %97 = arith.mulf %96, %95 : vector<8x128xf32>
    %98 = math.tanh %97 : vector<8x128xf32>
    %cst_43 = arith.constant 5.000000e-01 : f32
    %99 = vector.broadcast %cst_43 : f32 to vector<8x128xf32>
    %100 = arith.mulf %99, %98 : vector<8x128xf32>
    %cst_44 = arith.constant 5.000000e-01 : f32
    %101 = vector.broadcast %cst_44 : f32 to vector<8x128xf32>
    %102 = arith.addf %100, %101 : vector<8x128xf32>
    %103 = vector.extract_strided_slice %94 {offsets = [0, 128], sizes = [8, 128], strides = [1, 1]} : vector<8x512xf32> to vector<8x128xf32>
    %cst_45 = arith.constant 5.000000e-01 : f32
    %104 = vector.broadcast %cst_45 : f32 to vector<8x128xf32>
    %105 = arith.mulf %104, %103 : vector<8x128xf32>
    %106 = math.tanh %105 : vector<8x128xf32>
    %cst_46 = arith.constant 5.000000e-01 : f32
    %107 = vector.broadcast %cst_46 : f32 to vector<8x128xf32>
    %108 = arith.mulf %107, %106 : vector<8x128xf32>
    %cst_47 = arith.constant 5.000000e-01 : f32
    %109 = vector.broadcast %cst_47 : f32 to vector<8x128xf32>
    %110 = arith.addf %108, %109 : vector<8x128xf32>
    %111 = vector.extract_strided_slice %94 {offsets = [0, 256], sizes = [8, 128], strides = [1, 1]} : vector<8x512xf32> to vector<8x128xf32>
    %112 = math.tanh %111 : vector<8x128xf32>
    %113 = vector.extract_strided_slice %94 {offsets = [0, 384], sizes = [8, 128], strides = [1, 1]} : vector<8x512xf32> to vector<8x128xf32>
    %cst_48 = arith.constant 5.000000e-01 : f32
    %114 = vector.broadcast %cst_48 : f32 to vector<8x128xf32>
    %115 = arith.mulf %114, %113 : vector<8x128xf32>
    %116 = math.tanh %115 : vector<8x128xf32>
    %cst_49 = arith.constant 5.000000e-01 : f32
    %117 = vector.broadcast %cst_49 : f32 to vector<8x128xf32>
    %118 = arith.mulf %117, %116 : vector<8x128xf32>
    %cst_50 = arith.constant 5.000000e-01 : f32
    %119 = vector.broadcast %cst_50 : f32 to vector<8x128xf32>
    %120 = arith.addf %118, %119 : vector<8x128xf32>
    %121 = arith.mulf %110, %84 : vector<8x128xf32>
    %122 = arith.mulf %102, %112 : vector<8x128xf32>
    %123 = arith.addf %121, %122 : vector<8x128xf32>
    %124 = math.tanh %123 : vector<8x128xf32>
    %125 = arith.mulf %120, %124 : vector<8x128xf32>
    %126 = arith.index_cast %90 : i32 to index
    %c0_51 = arith.constant 0 : index
    %127 = vector.load %arg13[%126, %c0_51] : memref<64x128xf32, #tpu.memory_space<vmem>>, vector<8x128xf32>
    tpu.vector_store %arg13[%126, %c0_51], %125 {strides = array<i32>} : memref<64x128xf32, #tpu.memory_space<vmem>>, vector<8x128xf32>,
    %c3_i32 = arith.constant 3 : i32
    %c8_i32_52 = arith.constant 8 : i32
    %128 = arith.muli %c3_i32, %c8_i32_52 : i32
    %129 = tpu.assume_multiple %128, 8 : i32
    %130 = arith.index_cast %129 : i32 to index
    %c0_53 = arith.constant 0 : index
    %131 = vector.load %arg12[%130, %c0_53] : memref<64x512xf32, #tpu.memory_space<vmem>>, vector<8x512xf32>
    %cst_54 = arith.constant dense<0.000000e+00> : vector<8x512xf32>
    %132 = tpu.matmul %125, %8, %cst_54 {dimension_numbers = #tpu.dot_dimension_numbers<[1], [0], [0], [1], [0, 0, 1, 1], [], []>} : vector<8x128xf32>, vector<128x512xf32>, vector<8x512xf32> -> vector<8x512xf32>
    %133 = arith.addf %131, %132 : vector<8x512xf32>
    %134 = vector.extract_strided_slice %133 {offsets = [0, 0], sizes = [8, 128], strides = [1, 1]} : vector<8x512xf32> to vector<8x128xf32>
    %cst_55 = arith.constant 5.000000e-01 : f32
    %135 = vector.broadcast %cst_55 : f32 to vector<8x128xf32>
    %136 = arith.mulf %135, %134 : vector<8x128xf32>
    %137 = math.tanh %136 : vector<8x128xf32>
    %cst_56 = arith.constant 5.000000e-01 : f32
    %138 = vector.broadcast %cst_56 : f32 to vector<8x128xf32>
    %139 = arith.mulf %138, %137 : vector<8x128xf32>
    %cst_57 = arith.constant 5.000000e-01 : f32
    %140 = vector.broadcast %cst_57 : f32 to vector<8x128xf32>
    %141 = arith.addf %139, %140 : vector<8x128xf32>
    %142 = vector.extract_strided_slice %133 {offsets = [0, 128], sizes = [8, 128], strides = [1, 1]} : vector<8x512xf32> to vector<8x128xf32>
    %cst_58 = arith.constant 5.000000e-01 : f32
    %143 = vector.broadcast %cst_58 : f32 to vector<8x128xf32>
    %144 = arith.mulf %143, %142 : vector<8x128xf32>
    %145 = math.tanh %144 : vector<8x128xf32>
    %cst_59 = arith.constant 5.000000e-01 : f32
    %146 = vector.broadcast %cst_59 : f32 to vector<8x128xf32>
    %147 = arith.mulf %146, %145 : vector<8x128xf32>
    %cst_60 = arith.constant 5.000000e-01 : f32
    %148 = vector.broadcast %cst_60 : f32 to vector<8x128xf32>
    %149 = arith.addf %147, %148 : vector<8x128xf32>
    %150 = vector.extract_strided_slice %133 {offsets = [0, 256], sizes = [8, 128], strides = [1, 1]} : vector<8x512xf32> to vector<8x128xf32>
    %151 = math.tanh %150 : vector<8x128xf32>
    %152 = vector.extract_strided_slice %133 {offsets = [0, 384], sizes = [8, 128], strides = [1, 1]} : vector<8x512xf32> to vector<8x128xf32>
    %cst_61 = arith.constant 5.000000e-01 : f32
    %153 = vector.broadcast %cst_61 : f32 to vector<8x128xf32>
    %154 = arith.mulf %153, %152 : vector<8x128xf32>
    %155 = math.tanh %154 : vector<8x128xf32>
    %cst_62 = arith.constant 5.000000e-01 : f32
    %156 = vector.broadcast %cst_62 : f32 to vector<8x128xf32>
    %157 = arith.mulf %156, %155 : vector<8x128xf32>
    %cst_63 = arith.constant 5.000000e-01 : f32
    %158 = vector.broadcast %cst_63 : f32 to vector<8x128xf32>
    %159 = arith.addf %157, %158 : vector<8x128xf32>
    %160 = arith.mulf %149, %123 : vector<8x128xf32>
    %161 = arith.mulf %141, %151 : vector<8x128xf32>
    %162 = arith.addf %160, %161 : vector<8x128xf32>
    %163 = math.tanh %162 : vector<8x128xf32>
    %164 = arith.mulf %159, %163 : vector<8x128xf32>
    %165 = arith.index_cast %129 : i32 to index
    %c0_64 = arith.constant 0 : index
    %166 = vector.load %arg13[%165, %c0_64] : memref<64x128xf32, #tpu.memory_space<vmem>>, vector<8x128xf32>
    tpu.vector_store %arg13[%165, %c0_64], %164 {strides = array<i32>} : memref<64x128xf32, #tpu.memory_space<vmem>>, vector<8x128xf32>,
    %c4_i32 = arith.constant 4 : i32
    %c8_i32_65 = arith.constant 8 : i32
    %167 = arith.muli %c4_i32, %c8_i32_65 : i32
    %168 = tpu.assume_multiple %167, 8 : i32
    %169 = arith.index_cast %168 : i32 to index
    %c0_66 = arith.constant 0 : index
    %170 = vector.load %arg12[%169, %c0_66] : memref<64x512xf32, #tpu.memory_space<vmem>>, vector<8x512xf32>
    %cst_67 = arith.constant dense<0.000000e+00> : vector<8x512xf32>
    %171 = tpu.matmul %164, %8, %cst_67 {dimension_numbers = #tpu.dot_dimension_numbers<[1], [0], [0], [1], [0, 0, 1, 1], [], []>} : vector<8x128xf32>, vector<128x512xf32>, vector<8x512xf32> -> vector<8x512xf32>
    %172 = arith.addf %170, %171 : vector<8x512xf32>
    %173 = vector.extract_strided_slice %172 {offsets = [0, 0], sizes = [8, 128], strides = [1, 1]} : vector<8x512xf32> to vector<8x128xf32>
    %cst_68 = arith.constant 5.000000e-01 : f32
    %174 = vector.broadcast %cst_68 : f32 to vector<8x128xf32>
    %175 = arith.mulf %174, %173 : vector<8x128xf32>
    %176 = math.tanh %175 : vector<8x128xf32>
    %cst_69 = arith.constant 5.000000e-01 : f32
    %177 = vector.broadcast %cst_69 : f32 to vector<8x128xf32>
    %178 = arith.mulf %177, %176 : vector<8x128xf32>
    %cst_70 = arith.constant 5.000000e-01 : f32
    %179 = vector.broadcast %cst_70 : f32 to vector<8x128xf32>
    %180 = arith.addf %178, %179 : vector<8x128xf32>
    %181 = vector.extract_strided_slice %172 {offsets = [0, 128], sizes = [8, 128], strides = [1, 1]} : vector<8x512xf32> to vector<8x128xf32>
    %cst_71 = arith.constant 5.000000e-01 : f32
    %182 = vector.broadcast %cst_71 : f32 to vector<8x128xf32>
    %183 = arith.mulf %182, %181 : vector<8x128xf32>
    %184 = math.tanh %183 : vector<8x128xf32>
    %cst_72 = arith.constant 5.000000e-01 : f32
    %185 = vector.broadcast %cst_72 : f32 to vector<8x128xf32>
    %186 = arith.mulf %185, %184 : vector<8x128xf32>
    %cst_73 = arith.constant 5.000000e-01 : f32
    %187 = vector.broadcast %cst_73 : f32 to vector<8x128xf32>
    %188 = arith.addf %186, %187 : vector<8x128xf32>
    %189 = vector.extract_strided_slice %172 {offsets = [0, 256], sizes = [8, 128], strides = [1, 1]} : vector<8x512xf32> to vector<8x128xf32>
    %190 = math.tanh %189 : vector<8x128xf32>
    %191 = vector.extract_strided_slice %172 {offsets = [0, 384], sizes = [8, 128], strides = [1, 1]} : vector<8x512xf32> to vector<8x128xf32>
    %cst_74 = arith.constant 5.000000e-01 : f32
    %192 = vector.broadcast %cst_74 : f32 to vector<8x128xf32>
    %193 = arith.mulf %192, %191 : vector<8x128xf32>
    %194 = math.tanh %193 : vector<8x128xf32>
    %cst_75 = arith.constant 5.000000e-01 : f32
    %195 = vector.broadcast %cst_75 : f32 to vector<8x128xf32>
    %196 = arith.mulf %195, %194 : vector<8x128xf32>
    %cst_76 = arith.constant 5.000000e-01 : f32
    %197 = vector.broadcast %cst_76 : f32 to vector<8x128xf32>
    %198 = arith.addf %196, %197 : vector<8x128xf32>
    %199 = arith.mulf %188, %162 : vector<8x128xf32>
    %200 = arith.mulf %180, %190 : vector<8x128xf32>
    %201 = arith.addf %199, %200 : vector<8x128xf32>
    %202 = math.tanh %201 : vector<8x128xf32>
    %203 = arith.mulf %198, %202 : vector<8x128xf32>
    %204 = arith.index_cast %168 : i32 to index
    %c0_77 = arith.constant 0 : index
    %205 = vector.load %arg13[%204, %c0_77] : memref<64x128xf32, #tpu.memory_space<vmem>>, vector<8x128xf32>
    tpu.vector_store %arg13[%204, %c0_77], %203 {strides = array<i32>} : memref<64x128xf32, #tpu.memory_space<vmem>>, vector<8x128xf32>,
    %c5_i32 = arith.constant 5 : i32
    %c8_i32_78 = arith.constant 8 : i32
    %206 = arith.muli %c5_i32, %c8_i32_78 : i32
    %207 = tpu.assume_multiple %206, 8 : i32
    %208 = arith.index_cast %207 : i32 to index
    %c0_79 = arith.constant 0 : index
    %209 = vector.load %arg12[%208, %c0_79] : memref<64x512xf32, #tpu.memory_space<vmem>>, vector<8x512xf32>
    %cst_80 = arith.constant dense<0.000000e+00> : vector<8x512xf32>
    %210 = tpu.matmul %203, %8, %cst_80 {dimension_numbers = #tpu.dot_dimension_numbers<[1], [0], [0], [1], [0, 0, 1, 1], [], []>} : vector<8x128xf32>, vector<128x512xf32>, vector<8x512xf32> -> vector<8x512xf32>
    %211 = arith.addf %209, %210 : vector<8x512xf32>
    %212 = vector.extract_strided_slice %211 {offsets = [0, 0], sizes = [8, 128], strides = [1, 1]} : vector<8x512xf32> to vector<8x128xf32>
    %cst_81 = arith.constant 5.000000e-01 : f32
    %213 = vector.broadcast %cst_81 : f32 to vector<8x128xf32>
    %214 = arith.mulf %213, %212 : vector<8x128xf32>
    %215 = math.tanh %214 : vector<8x128xf32>
    %cst_82 = arith.constant 5.000000e-01 : f32
    %216 = vector.broadcast %cst_82 : f32 to vector<8x128xf32>
    %217 = arith.mulf %216, %215 : vector<8x128xf32>
    %cst_83 = arith.constant 5.000000e-01 : f32
    %218 = vector.broadcast %cst_83 : f32 to vector<8x128xf32>
    %219 = arith.addf %217, %218 : vector<8x128xf32>
    %220 = vector.extract_strided_slice %211 {offsets = [0, 128], sizes = [8, 128], strides = [1, 1]} : vector<8x512xf32> to vector<8x128xf32>
    %cst_84 = arith.constant 5.000000e-01 : f32
    %221 = vector.broadcast %cst_84 : f32 to vector<8x128xf32>
    %222 = arith.mulf %221, %220 : vector<8x128xf32>
    %223 = math.tanh %222 : vector<8x128xf32>
    %cst_85 = arith.constant 5.000000e-01 : f32
    %224 = vector.broadcast %cst_85 : f32 to vector<8x128xf32>
    %225 = arith.mulf %224, %223 : vector<8x128xf32>
    %cst_86 = arith.constant 5.000000e-01 : f32
    %226 = vector.broadcast %cst_86 : f32 to vector<8x128xf32>
    %227 = arith.addf %225, %226 : vector<8x128xf32>
    %228 = vector.extract_strided_slice %211 {offsets = [0, 256], sizes = [8, 128], strides = [1, 1]} : vector<8x512xf32> to vector<8x128xf32>
    %229 = math.tanh %228 : vector<8x128xf32>
    %230 = vector.extract_strided_slice %211 {offsets = [0, 384], sizes = [8, 128], strides = [1, 1]} : vector<8x512xf32> to vector<8x128xf32>
    %cst_87 = arith.constant 5.000000e-01 : f32
    %231 = vector.broadcast %cst_87 : f32 to vector<8x128xf32>
    %232 = arith.mulf %231, %230 : vector<8x128xf32>
    %233 = math.tanh %232 : vector<8x128xf32>
    %cst_88 = arith.constant 5.000000e-01 : f32
    %234 = vector.broadcast %cst_88 : f32 to vector<8x128xf32>
    %235 = arith.mulf %234, %233 : vector<8x128xf32>
    %cst_89 = arith.constant 5.000000e-01 : f32
    %236 = vector.broadcast %cst_89 : f32 to vector<8x128xf32>
    %237 = arith.addf %235, %236 : vector<8x128xf32>
    %238 = arith.mulf %227, %201 : vector<8x128xf32>
    %239 = arith.mulf %219, %229 : vector<8x128xf32>
    %240 = arith.addf %238, %239 : vector<8x128xf32>
    %241 = math.tanh %240 : vector<8x128xf32>
    %242 = arith.mulf %237, %241 : vector<8x128xf32>
    %243 = arith.index_cast %207 : i32 to index
    %c0_90 = arith.constant 0 : index
    %244 = vector.load %arg13[%243, %c0_90] : memref<64x128xf32, #tpu.memory_space<vmem>>, vector<8x128xf32>
    tpu.vector_store %arg13[%243, %c0_90], %242 {strides = array<i32>} : memref<64x128xf32, #tpu.memory_space<vmem>>, vector<8x128xf32>,
    %c6_i32 = arith.constant 6 : i32
    %c8_i32_91 = arith.constant 8 : i32
    %245 = arith.muli %c6_i32, %c8_i32_91 : i32
    %246 = tpu.assume_multiple %245, 8 : i32
    %247 = arith.index_cast %246 : i32 to index
    %c0_92 = arith.constant 0 : index
    %248 = vector.load %arg12[%247, %c0_92] : memref<64x512xf32, #tpu.memory_space<vmem>>, vector<8x512xf32>
    %cst_93 = arith.constant dense<0.000000e+00> : vector<8x512xf32>
    %249 = tpu.matmul %242, %8, %cst_93 {dimension_numbers = #tpu.dot_dimension_numbers<[1], [0], [0], [1], [0, 0, 1, 1], [], []>} : vector<8x128xf32>, vector<128x512xf32>, vector<8x512xf32> -> vector<8x512xf32>
    %250 = arith.addf %248, %249 : vector<8x512xf32>
    %251 = vector.extract_strided_slice %250 {offsets = [0, 0], sizes = [8, 128], strides = [1, 1]} : vector<8x512xf32> to vector<8x128xf32>
    %cst_94 = arith.constant 5.000000e-01 : f32
    %252 = vector.broadcast %cst_94 : f32 to vector<8x128xf32>
    %253 = arith.mulf %252, %251 : vector<8x128xf32>
    %254 = math.tanh %253 : vector<8x128xf32>
    %cst_95 = arith.constant 5.000000e-01 : f32
    %255 = vector.broadcast %cst_95 : f32 to vector<8x128xf32>
    %256 = arith.mulf %255, %254 : vector<8x128xf32>
    %cst_96 = arith.constant 5.000000e-01 : f32
    %257 = vector.broadcast %cst_96 : f32 to vector<8x128xf32>
    %258 = arith.addf %256, %257 : vector<8x128xf32>
    %259 = vector.extract_strided_slice %250 {offsets = [0, 128], sizes = [8, 128], strides = [1, 1]} : vector<8x512xf32> to vector<8x128xf32>
    %cst_97 = arith.constant 5.000000e-01 : f32
    %260 = vector.broadcast %cst_97 : f32 to vector<8x128xf32>
    %261 = arith.mulf %260, %259 : vector<8x128xf32>
    %262 = math.tanh %261 : vector<8x128xf32>
    %cst_98 = arith.constant 5.000000e-01 : f32
    %263 = vector.broadcast %cst_98 : f32 to vector<8x128xf32>
    %264 = arith.mulf %263, %262 : vector<8x128xf32>
    %cst_99 = arith.constant 5.000000e-01 : f32
    %265 = vector.broadcast %cst_99 : f32 to vector<8x128xf32>
    %266 = arith.addf %264, %265 : vector<8x128xf32>
    %267 = vector.extract_strided_slice %250 {offsets = [0, 256], sizes = [8, 128], strides = [1, 1]} : vector<8x512xf32> to vector<8x128xf32>
    %268 = math.tanh %267 : vector<8x128xf32>
    %269 = vector.extract_strided_slice %250 {offsets = [0, 384], sizes = [8, 128], strides = [1, 1]} : vector<8x512xf32> to vector<8x128xf32>
    %cst_100 = arith.constant 5.000000e-01 : f32
    %270 = vector.broadcast %cst_100 : f32 to vector<8x128xf32>
    %271 = arith.mulf %270, %269 : vector<8x128xf32>
    %272 = math.tanh %271 : vector<8x128xf32>
    %cst_101 = arith.constant 5.000000e-01 : f32
    %273 = vector.broadcast %cst_101 : f32 to vector<8x128xf32>
    %274 = arith.mulf %273, %272 : vector<8x128xf32>
    %cst_102 = arith.constant 5.000000e-01 : f32
    %275 = vector.broadcast %cst_102 : f32 to vector<8x128xf32>
    %276 = arith.addf %274, %275 : vector<8x128xf32>
    %277 = arith.mulf %266, %240 : vector<8x128xf32>
    %278 = arith.mulf %258, %268 : vector<8x128xf32>
    %279 = arith.addf %277, %278 : vector<8x128xf32>
    %280 = math.tanh %279 : vector<8x128xf32>
    %281 = arith.mulf %276, %280 : vector<8x128xf32>
    %282 = arith.index_cast %246 : i32 to index
    %c0_103 = arith.constant 0 : index
    %283 = vector.load %arg13[%282, %c0_103] : memref<64x128xf32, #tpu.memory_space<vmem>>, vector<8x128xf32>
    tpu.vector_store %arg13[%282, %c0_103], %281 {strides = array<i32>} : memref<64x128xf32, #tpu.memory_space<vmem>>, vector<8x128xf32>,
    %c7_i32 = arith.constant 7 : i32
    %c8_i32_104 = arith.constant 8 : i32
    %284 = arith.muli %c7_i32, %c8_i32_104 : i32
    %285 = tpu.assume_multiple %284, 8 : i32
    %286 = arith.index_cast %285 : i32 to index
    %c0_105 = arith.constant 0 : index
    %287 = vector.load %arg12[%286, %c0_105] : memref<64x512xf32, #tpu.memory_space<vmem>>, vector<8x512xf32>
    %cst_106 = arith.constant dense<0.000000e+00> : vector<8x512xf32>
    %288 = tpu.matmul %281, %8, %cst_106 {dimension_numbers = #tpu.dot_dimension_numbers<[1], [0], [0], [1], [0, 0, 1, 1], [], []>} : vector<8x128xf32>, vector<128x512xf32>, vector<8x512xf32> -> vector<8x512xf32>
    %289 = arith.addf %287, %288 : vector<8x512xf32>
    %290 = vector.extract_strided_slice %289 {offsets = [0, 0], sizes = [8, 128], strides = [1, 1]} : vector<8x512xf32> to vector<8x128xf32>
    %cst_107 = arith.constant 5.000000e-01 : f32
    %291 = vector.broadcast %cst_107 : f32 to vector<8x128xf32>
    %292 = arith.mulf %291, %290 : vector<8x128xf32>
    %293 = math.tanh %292 : vector<8x128xf32>
    %cst_108 = arith.constant 5.000000e-01 : f32
    %294 = vector.broadcast %cst_108 : f32 to vector<8x128xf32>
    %295 = arith.mulf %294, %293 : vector<8x128xf32>
    %cst_109 = arith.constant 5.000000e-01 : f32
    %296 = vector.broadcast %cst_109 : f32 to vector<8x128xf32>
    %297 = arith.addf %295, %296 : vector<8x128xf32>
    %298 = vector.extract_strided_slice %289 {offsets = [0, 128], sizes = [8, 128], strides = [1, 1]} : vector<8x512xf32> to vector<8x128xf32>
    %cst_110 = arith.constant 5.000000e-01 : f32
    %299 = vector.broadcast %cst_110 : f32 to vector<8x128xf32>
    %300 = arith.mulf %299, %298 : vector<8x128xf32>
    %301 = math.tanh %300 : vector<8x128xf32>
    %cst_111 = arith.constant 5.000000e-01 : f32
    %302 = vector.broadcast %cst_111 : f32 to vector<8x128xf32>
    %303 = arith.mulf %302, %301 : vector<8x128xf32>
    %cst_112 = arith.constant 5.000000e-01 : f32
    %304 = vector.broadcast %cst_112 : f32 to vector<8x128xf32>
    %305 = arith.addf %303, %304 : vector<8x128xf32>
    %306 = vector.extract_strided_slice %289 {offsets = [0, 256], sizes = [8, 128], strides = [1, 1]} : vector<8x512xf32> to vector<8x128xf32>
    %307 = math.tanh %306 : vector<8x128xf32>
    %308 = vector.extract_strided_slice %289 {offsets = [0, 384], sizes = [8, 128], strides = [1, 1]} : vector<8x512xf32> to vector<8x128xf32>
    %cst_113 = arith.constant 5.000000e-01 : f32
    %309 = vector.broadcast %cst_113 : f32 to vector<8x128xf32>
    %310 = arith.mulf %309, %308 : vector<8x128xf32>
    %311 = math.tanh %310 : vector<8x128xf32>
    %cst_114 = arith.constant 5.000000e-01 : f32
    %312 = vector.broadcast %cst_114 : f32 to vector<8x128xf32>
    %313 = arith.mulf %312, %311 : vector<8x128xf32>
    %cst_115 = arith.constant 5.000000e-01 : f32
    %314 = vector.broadcast %cst_115 : f32 to vector<8x128xf32>
    %315 = arith.addf %313, %314 : vector<8x128xf32>
    %316 = arith.mulf %305, %279 : vector<8x128xf32>
    %317 = arith.mulf %297, %307 : vector<8x128xf32>
    %318 = arith.addf %316, %317 : vector<8x128xf32>
    %319 = math.tanh %318 : vector<8x128xf32>
    %320 = arith.mulf %315, %319 : vector<8x128xf32>
    %321 = arith.index_cast %285 : i32 to index
    %c0_116 = arith.constant 0 : index
    %322 = vector.load %arg13[%321, %c0_116] : memref<64x128xf32, #tpu.memory_space<vmem>>, vector<8x128xf32>
    tpu.vector_store %arg13[%321, %c0_116], %320 {strides = array<i32>} : memref<64x128xf32, #tpu.memory_space<vmem>>, vector<8x128xf32>,
    %c8_i32_117 = arith.constant 8 : i32
    %c0_118 = arith.constant 0 : index
    %c0_119 = arith.constant 0 : index
    %323 = vector.load %arg13[%c0_118, %c0_119] : memref<64x128xf32, #tpu.memory_space<vmem>>, vector<64x128xf32>
    %c0_120 = arith.constant 0 : index
    %c0_121 = arith.constant 0 : index
    %324 = vector.load %arg7[%c0_120, %c0_121] : memref<128x128xf32, #tpu.memory_space<vmem>>, vector<128x128xf32>
    %cst_122 = arith.constant dense<0.000000e+00> : vector<64x128xf32>
    %325 = tpu.matmul %323, %324, %cst_122 {dimension_numbers = #tpu.dot_dimension_numbers<[1], [0], [0], [1], [0, 0, 1, 1], [], []>} : vector<64x128xf32>, vector<128x128xf32>, vector<64x128xf32> -> vector<64x128xf32>
    %c0_123 = arith.constant 0 : index
    %c0_124 = arith.constant 0 : index
    %326 = vector.load %arg8[%c0_123, %c0_124] : memref<1x128xf32, #tpu.memory_space<vmem>>, vector<1x128xf32>
    %327 = vector.broadcast %326 : vector<1x128xf32> to vector<64x128xf32>
    %328 = arith.addf %325, %327 : vector<64x128xf32>
    %329 = vector.shape_cast %328 : vector<64x128xf32> to vector<8x8x128xf32>
    %c0_125 = arith.constant 0 : index
    %c0_126 = arith.constant 0 : index
    %c0_127 = arith.constant 0 : index
    %330 = vector.load %arg9[%c0_125, %c0_126, %c0_127] : memref<8x8x128xf32, #tpu.memory_space<vmem>>, vector<8x8x128xf32>
    tpu.vector_store %arg9[%c0_125, %c0_126, %c0_127], %329 {strides = array<i32>} : memref<8x8x128xf32, #tpu.memory_space<vmem>>, vector<8x8x128xf32>,
    %c0_128 = arith.constant 0 : index
    %c0_129 = arith.constant 0 : index
    %331 = vector.load %arg10[%c0_128, %c0_129] : memref<8x128xf32, #tpu.memory_space<vmem>>, vector<8x128xf32>
    tpu.vector_store %arg10[%c0_128, %c0_129], %320 {strides = array<i32>} : memref<8x128xf32, #tpu.memory_space<vmem>>, vector<8x128xf32>,
    %c0_130 = arith.constant 0 : index
    %c0_131 = arith.constant 0 : index
    %332 = vector.load %arg11[%c0_130, %c0_131] : memref<8x128xf32, #tpu.memory_space<vmem>>, vector<8x128xf32>
    tpu.vector_store %arg11[%c0_130, %c0_131], %318 {strides = array<i32>} : memref<8x128xf32, #tpu.memory_space<vmem>>, vector<8x128xf32>,
    return
  }
  func.func @transform_0(%arg0: i32) -> (i32, i32, i32) {
    %c0_i32 = arith.constant 0 : i32
    %c0_i32_0 = arith.constant 0 : i32
    %c0_i32_1 = arith.constant 0 : i32
    return %c0_i32, %arg0, %c0_i32_0 : i32, i32, i32
  }
  func.func @transform_1(%arg0: i32) -> (i32, i32) {
    %c0_i32 = arith.constant 0 : i32
    %c0_i32_0 = arith.constant 0 : i32
    return %arg0, %c0_i32 : i32, i32
  }
  func.func @transform_2(%arg0: i32) -> (i32, i32) {
    %c0_i32 = arith.constant 0 : i32
    %c0_i32_0 = arith.constant 0 : i32
    return %arg0, %c0_i32 : i32, i32
  }
  func.func @transform_3(%arg0: i32) -> (i32, i32) {
    %c0_i32 = arith.constant 0 : i32
    %c0_i32_0 = arith.constant 0 : i32
    %c0_i32_1 = arith.constant 0 : i32
    return %c0_i32, %c0_i32_0 : i32, i32
  }
  func.func @transform_4(%arg0: i32) -> (i32, i32) {
    %c0_i32 = arith.constant 0 : i32
    %c0_i32_0 = arith.constant 0 : i32
    %c0_i32_1 = arith.constant 0 : i32
    return %c0_i32, %c0_i32_0 : i32, i32
  }
  func.func @transform_5(%arg0: i32) -> (i32, i32) {
    %c0_i32 = arith.constant 0 : i32
    %c0_i32_0 = arith.constant 0 : i32
    %c0_i32_1 = arith.constant 0 : i32
    return %c0_i32, %c0_i32_0 : i32, i32
  }
  func.func @transform_6(%arg0: i32) -> (i32, i32) {
    %c0_i32 = arith.constant 0 : i32
    %c0_i32_0 = arith.constant 0 : i32
    %c0_i32_1 = arith.constant 0 : i32
    return %c0_i32, %c0_i32_0 : i32, i32
  }
  func.func @transform_7(%arg0: i32) -> (i32, i32) {
    %c0_i32 = arith.constant 0 : i32
    %c0_i32_0 = arith.constant 0 : i32
    %c0_i32_1 = arith.constant 0 : i32
    return %c0_i32, %c0_i32_0 : i32, i32
  }
  func.func @transform_8(%arg0: i32) -> (i32, i32, i32) {
    %c0_i32 = arith.constant 0 : i32
    %c0_i32_0 = arith.constant 0 : i32
    %c0_i32_1 = arith.constant 0 : i32
    return %c0_i32, %arg0, %c0_i32_0 : i32, i32, i32
  }
  func.func @transform_9(%arg0: i32) -> (i32, i32) {
    %c0_i32 = arith.constant 0 : i32
    %c0_i32_0 = arith.constant 0 : i32
    return %arg0, %c0_i32 : i32, i32
  }
  func.func @transform_10(%arg0: i32) -> (i32, i32) {
    %c0_i32 = arith.constant 0 : i32
    %c0_i32_0 = arith.constant 0 : i32
    return %arg0, %c0_i32 : i32, i32
  }
}

</mosaic_0001>

<llo_original>
// kernel: tpu_custom_call.1
$region0: #{tpu_custom_call.1}
  #allocation0 [shape = 'u32[]', space=smem, size = 0x4, offset = 0x4, fixed_abs, tag = 'smem constant byte address 0x4 - core index']
  #allocation1 [shape = 'u32[144,128]{1,0:T(1,128)}', space=vmem, size = 0x12000, scoped, tag = 'internal scratch']
  #allocation2 [shape = 'f32[64,512]{1,0:T(8,128)}', space=vmem, size = 0x20000, scoped, tag = 'scratch operand']
  #allocation3 [shape = 'f32[64,128]{1,0:T(8,128)}', space=vmem, size = 0x8000, scoped, tag = 'scratch operand']
  %s0 = inlined_call_operand.hbm [shape: f32[8,8,8], index: 0, kind: input, shape index: {}]
  %s1 = inlined_call_operand.hbm [shape: f32[8,128], index: 1, kind: input, shape index: {}]
  %s2 = inlined_call_operand.hbm [shape: f32[8,128], index: 2, kind: input, shape index: {}]
  %s3 = inlined_call_operand.hbm [shape: f32[8,512], index: 3, kind: input, shape index: {}]
  %s4 = inlined_call_operand.hbm [shape: f32[128,512], index: 4, kind: input, shape index: {}]
  %s5 = inlined_call_operand.vmem [shape: f32[1,512], index: 5, kind: input, shape index: {}]
  %s6 = inlined_call_operand.hbm [shape: f32[128,128], index: 6, kind: input, shape index: {}]
  %s7 = inlined_call_operand.vmem [shape: f32[1,128], index: 7, kind: input, shape index: {}]
  %s8 = inlined_call_operand.hbm [shape: f32[8,8,128], index: 8, kind: output, shape index: {0}]
  %s9 = inlined_call_operand.hbm [shape: f32[8,128], index: 9, kind: output, shape index: {1}]
  %s10 = inlined_call_operand.hbm [shape: f32[8,128], index: 10, kind: output, shape index: {2}]
  %11 = xla_tuple %s8, %s9, %s10
  %s12 = sld [smem:[#allocation0]]
  $region82: #{tpu_custom_call.1} parent=0
    _
  %s14 = ssub.s32 1, %s12
  %s15 = scalar_select 0, %s14, %s12
  $region1: #{tpu_custom_call.1} parent=0
    #allocation4 [shape = 'u8[32768]{0}', space=vmem, size = 0x8000, scoped, tag = 'input window, operand 0, single buffered']
    #allocation5 [shape = 's32[1]{0}', space=sflag, size = 0x4, scoped, tag = 'scoped memory for tpu_custom_call.1']
    #allocation6 [shape = 's32[1]{0}', space=sflag, size = 0x4, scoped, tag = 'scoped memory for tpu_custom_call.1']
    #allocation7 [shape = 'u8[4096]{0}', space=vmem, size = 0x1000, scoped, tag = 'input window, operand 1, single buffered']
    #allocation8 [shape = 's32[1]{0}', space=sflag, size = 0x4, scoped, tag = 'scoped memory for tpu_custom_call.1']
    #allocation9 [shape = 'u8[4096]{0}', space=vmem, size = 0x1000, scoped, tag = 'input window, operand 2, single buffered']
    #allocation10 [shape = 'u8[16384]{0}', space=vmem, size = 0x4000, scoped, tag = 'input window, operand 3, single buffered']
    #allocation11 [shape = 's32[1]{0}', space=sflag, size = 0x4, scoped, tag = 'scoped memory for tpu_custom_call.1']
    #allocation12 [shape = 'u8[262144]{0}', space=vmem, size = 0x40000, scoped, tag = 'input window, operand 4, single buffered']
    #allocation13 [shape = 'u8[65536]{0}', space=vmem, size = 0x10000, scoped, tag = 'input window, operand 6, single buffered']
    #allocation14 [shape = 's32[1]{0}', space=sflag, size = 0x4, scoped, tag = 'scoped memory for tpu_custom_call.1']
    #allocation15 [shape = 'u8[32768]{0}', space=vmem, size = 0x8000, scoped, tag = 'output window, operand 0, single buffered']
    #allocation16 [shape = 'u8[4096]{0}', space=vmem, size = 0x1000, scoped, tag = 'output window, operand 1, single buffered']
    #allocation17 [shape = 's32[1]{0}', space=sflag, size = 0x4, scoped, tag = 'scoped memory for tpu_custom_call.1']
    #allocation18 [shape = 'u8[4096]{0}', space=vmem, size = 0x1000, scoped, tag = 'output window, operand 2, single buffered']
    %16 = vsyncpa [#allocation5], 0
    %17 = vsyncpa [#allocation8], 0
    %18 = vsyncpa [#allocation11], 0
    %19 = vsyncpa [#allocation14], 0
    %20 = vsyncpa [#allocation6], 0
    %21 = vsyncpa [#allocation17], 0
    // Predicated region
    $region2: #{tpu_custom_call.1} parent=1 // pred_check
      _
    $region3: #{tpu_custom_call.1} parent=1 // pred_check_branch
      %23 = sbr.rel (0) target = $region5
    $region4: #{tpu_custom_call.1} parent=1 // pred_region
      %s25 = ssub.s32 1024, 1024
      %26 = vsyncadd [#allocation5], %s25
      %s27 = sshll.u32 [#allocation4], 4
      %s28 = int_to_ptr.vmem [resolvable:$true] %s27
      %33 = dma.hbm_to_vmem [thread:$0]  %s0, 1024, %s28, [#allocation5], 128, 128, 8
    $region5: #{tpu_custom_call.1} parent=1 // pred_fallthru
      _
    // Predicated region
    $region6: #{tpu_custom_call.1} parent=1 // pred_check
      _
    $region7: #{tpu_custom_call.1} parent=1 // pred_check_branch
      %35 = sbr.rel (0) target = $region9
    $region8: #{tpu_custom_call.1} parent=1 // pred_region
      %s37 = ssub.s32 128, 128
      %38 = vsyncadd [#allocation8], %s37
      %s40 = sshll.u32 [#allocation7], 4
      %s41 = int_to_ptr.vmem [resolvable:$true] %s40
      %43 = dma.hbm_to_vmem [thread:$0]  %s1, 128, %s41, [#allocation8]
    $region9: #{tpu_custom_call.1} parent=1 // pred_fallthru
      _
    // Predicated region
    $region10: #{tpu_custom_call.1} parent=1 // pred_check
      _
    $region11: #{tpu_custom_call.1} parent=1 // pred_check_branch
      %45 = sbr.rel (0) target = $region13
    $region12: #{tpu_custom_call.1} parent=1 // pred_region
      %s47 = ssub.s32 128, 128
      %48 = vsyncadd [#allocation8], %s47
      %s50 = sshll.u32 [#allocation9], 4
      %s51 = int_to_ptr.vmem [resolvable:$true] %s50
      %53 = dma.hbm_to_vmem [thread:$0]  %s2, 128, %s51, [#allocation8]
    $region13: #{tpu_custom_call.1} parent=1 // pred_fallthru
      _
    // Predicated region
    $region14: #{tpu_custom_call.1} parent=1 // pred_check
      _
    $region15: #{tpu_custom_call.1} parent=1 // pred_check_branch
      %55 = sbr.rel (0) target = $region17
    $region16: #{tpu_custom_call.1} parent=1 // pred_region
      %s57 = ssub.s32 512, 512
      %58 = vsyncadd [#allocation11], %s57
      %s60 = sshll.u32 [#allocation10], 4
      %s61 = int_to_ptr.vmem [resolvable:$true] %s60
      %63 = dma.hbm_to_vmem [thread:$0]  %s3, 512, %s61, [#allocation11]
    $region17: #{tpu_custom_call.1} parent=1 // pred_fallthru
      _
    // Predicated region
    $region18: #{tpu_custom_call.1} parent=1 // pred_check
      _
    $region19: #{tpu_custom_call.1} parent=1 // pred_check_branch
      %65 = sbr.rel (0) target = $region21
    $region20: #{tpu_custom_call.1} parent=1 // pred_region
      %s67 = ssub.s32 8192, 8192
      %68 = vsyncadd [#allocation11], %s67
      %s69 = sshll.u32 [#allocation12], 4
      %s70 = int_to_ptr.vmem [resolvable:$true] %s69
      %75 = dma.hbm_to_vmem [thread:$0]  %s4, 8192, %s70, [#allocation11], 512, 512, 32
    $region21: #{tpu_custom_call.1} parent=1 // pred_fallthru
      _
    // Predicated region
    $region22: #{tpu_custom_call.1} parent=1 // pred_check
      _
    $region23: #{tpu_custom_call.1} parent=1 // pred_check_branch
      %77 = sbr.rel (0) target = $region25
    $region24: #{tpu_custom_call.1} parent=1 // pred_region
      _
    $region25: #{tpu_custom_call.1} parent=1 // pred_fallthru
      _
    // Predicated region
    $region26: #{tpu_custom_call.1} parent=1 // pred_check
      _
    $region27: #{tpu_custom_call.1} parent=1 // pred_check_branch
      %79 = sbr.rel (0) target = $region29
    $region28: #{tpu_custom_call.1} parent=1 // pred_region
      %s81 = ssub.s32 2048, 2048
      %82 = vsyncadd [#allocation14], %s81
      %s83 = sshll.u32 [#allocation13], 4
      %s84 = int_to_ptr.vmem [resolvable:$true] %s83
      %89 = dma.hbm_to_vmem [thread:$0]  %s6, 2048, %s84, [#allocation14], 128, 128, 8
    $region29: #{tpu_custom_call.1} parent=1 // pred_fallthru
      _
    // Predicated region
    $region30: #{tpu_custom_call.1} parent=1 // pred_check
      _
    $region31: #{tpu_custom_call.1} parent=1 // pred_check_branch
      %91 = sbr.rel (0) target = $region33
    $region32: #{tpu_custom_call.1} parent=1 // pred_region
      _
    $region33: #{tpu_custom_call.1} parent=1 // pred_fallthru
      _
    // Predicated region
    $region34: #{tpu_custom_call.1} parent=1 // pred_check
      _
    $region35: #{tpu_custom_call.1} parent=1 // pred_check_branch
      %93 = sbr.rel (0) target = $region37
    $region36: #{tpu_custom_call.1} parent=1 // pred_region
      %94 = dma.done [#allocation5], 1024
    $region37: #{tpu_custom_call.1} parent=1 // pred_fallthru
      _
    // Predicated region
    $region38: #{tpu_custom_call.1} parent=1 // pred_check
      _
    $region39: #{tpu_custom_call.1} parent=1 // pred_check_branch
      %96 = sbr.rel (0) target = $region41
    $region40: #{tpu_custom_call.1} parent=1 // pred_region
      %97 = dma.done [#allocation8], 128
    $region41: #{tpu_custom_call.1} parent=1 // pred_fallthru
      _
    // Predicated region
    $region42: #{tpu_custom_call.1} parent=1 // pred_check
      _
    $region43: #{tpu_custom_call.1} parent=1 // pred_check_branch
      %99 = sbr.rel (0) target = $region45
    $region44: #{tpu_custom_call.1} parent=1 // pred_region
      %100 = dma.done [#allocation8], 128
    $region45: #{tpu_custom_call.1} parent=1 // pred_fallthru
      _
    // Predicated region
    $region46: #{tpu_custom_call.1} parent=1 // pred_check
      _
    $region47: #{tpu_custom_call.1} parent=1 // pred_check_branch
      %102 = sbr.rel (0) target = $region49
    $region48: #{tpu_custom_call.1} parent=1 // pred_region
      %103 = dma.done [#allocation11], 512
    $region49: #{tpu_custom_call.1} parent=1 // pred_fallthru
      _
    // Predicated region
    $region50: #{tpu_custom_call.1} parent=1 // pred_check
      _
    $region51: #{tpu_custom_call.1} parent=1 // pred_check_branch
      %105 = sbr.rel (0) target = $region53
    $region52: #{tpu_custom_call.1} parent=1 // pred_region
      %106 = dma.done [#allocation11], 8192
    $region53: #{tpu_custom_call.1} parent=1 // pred_fallthru
      _
    // Predicated region
    $region54: #{tpu_custom_call.1} parent=1 // pred_check
      _
    $region55: #{tpu_custom_call.1} parent=1 // pred_check_branch
      %108 = sbr.rel (0) target = $region57
    $region56: #{tpu_custom_call.1} parent=1 // pred_region
      %109 = dma.done [#allocation14], 2048
    $region57: #{tpu_custom_call.1} parent=1 // pred_fallthru
      _
    %v110 = vld [vmem:[#allocation4] sm:$0xff]
    %v111 = vld [vmem:[#allocation4 + $0x8] sm:$0xff]
    %v112 = vld [vmem:[#allocation4 + $0x10] sm:$0xff]
    %v113 = vld [vmem:[#allocation4 + $0x18] sm:$0xff]
    %v114 = vld [vmem:[#allocation4 + $0x20] sm:$0xff]
    %v115 = vld [vmem:[#allocation4 + $0x28] sm:$0xff]
    %v116 = vld [vmem:[#allocation4 + $0x30] sm:$0xff]
    %v117 = vld [vmem:[#allocation4 + $0x38] sm:$0xff]
    %v118 = vld [vmem:[#allocation10] sm:$0xff]
    %v119 = vld [vmem:[#allocation10 + $0x8] sm:$0xff]
    %v120 = vld [vmem:[#allocation10 + $0x10] sm:$0xff]
    %v121 = vld [vmem:[#allocation10 + $0x18] sm:$0xff]
    %v122 = vld [vmem:[%s5] sm:$0xf]
    %v124 = vlaneseq
    %v125 = vshrl.u32 %v124, 7
    %v126 = vsub.s32 0, %v125
    %v127 = vrot.slane %v122, %v126
    %v128 = vlaneseq
    %v129 = vshrl.u32 %v128, 7
    %v130 = vsub.s32 1, %v129
    %v131 = vrot.slane %v122, %v130
    %v132 = vlaneseq
    %v133 = vshrl.u32 %v132, 7
    %v134 = vsub.s32 2, %v133
    %v135 = vrot.slane %v122, %v134
    %v136 = vlaneseq
    %v137 = vshrl.u32 %v136, 7
    %v138 = vsub.s32 3, %v137
    %v139 = vrot.slane %v122, %v138
    %vm144 = vcmask 64512
    %v146 = vsel %vm144, %v110, 0
    %v149 = vsel %vm144, %v111, 0
    %v152 = vsel %vm144, %v112, 0
    %v155 = vsel %vm144, %v113, 0
    %v158 = vsel %vm144, %v114, 0
    %v161 = vsel %vm144, %v115, 0
    %v164 = vsel %vm144, %v116, 0
    %v167 = vsel %vm144, %v117, 0
    %169 = vmatprep.subr.mxu0 %v119
    %170 = vmatpush1.msra.mxu0 %v118
    %171 = vmatprep.subr.mxu0 0.0
    %172 = vmatpush1.msra.mxu0 0.0
    %173 = vmatprep.subr.mxu0 0.0
    %174 = vmatpush1.msra.mxu0 0.0
    %175 = vmatprep.subr.mxu0 0.0
    %176 = vmatpush1.msra.mxu0 0.0
    %177 = vmatprep.subr.mxu0 0.0
    %178 = vmatpush1.msra.mxu0 0.0
    %179 = vmatprep.subr.mxu0 0.0
    %180 = vmatpush1.msra.mxu0 0.0
    %181 = vmatprep.subr.mxu0 0.0
    %182 = vmatpush1.msra.mxu0 0.0
    %183 = vmatprep.subr.mxu0 0.0
    %184 = vmatpush1.msra.mxu0 0.0
    %185 = vmatprep.subr.mxu0 0.0
    %186 = vmatpush1.msra.mxu0 0.0
    %187 = vmatprep.subr.mxu0 0.0
    %188 = vmatpush1.msra.mxu0 0.0
    %189 = vmatprep.subr.mxu0 0.0
    %190 = vmatpush1.msra.mxu0 0.0
    %191 = vmatprep.subr.mxu0 0.0
    %192 = vmatpush1.msra.mxu0 0.0
    %193 = vmatprep.subr.mxu0 0.0
    %194 = vmatpush1.msra.mxu0 0.0
    %195 = vmatprep.subr.mxu0 0.0
    %196 = vmatpush1.msra.mxu0 0.0
    %197 = vmatprep.subr.mxu0 0.0
    %198 = vmatpush1.msra.mxu0 0.0
    %199 = vmatprep.subr.mxu0 0.0
    %200 = vmatpush1.msra.mxu0 0.0
    %201 = vmatprep.subr.mxu0 0.0
    %202 = vmatpush1.msra.mxu0 0.0
    %203 = vmatprep.subr.mxu0 0.0
    %204 = vmatpush1.msra.mxu0 0.0
    %205 = vmatprep.subr.mxu0 0.0
    %206 = vmatpush1.msra.mxu0 0.0
    %207 = vmatprep.subr.mxu0 0.0
    %208 = vmatpush1.msra.mxu0 0.0
    %209 = vmatprep.subr.mxu0 0.0
    %210 = vmatpush1.msra.mxu0 0.0
    %211 = vmatprep.subr.mxu0 0.0
    %212 = vmatpush1.msra.mxu0 0.0
    %213 = vmatprep.subr.mxu0 0.0
    %214 = vmatpush1.msra.mxu0 0.0
    %215 = vmatprep.subr.mxu0 0.0
    %216 = vmatpush1.msra.mxu0 0.0
    %217 = vmatprep.subr.mxu0 0.0
    %218 = vmatpush1.msra.mxu0 0.0
    %219 = vmatprep.subr.mxu0 0.0
    %220 = vmatpush1.msra.mxu0 0.0
    %221 = vmatprep.subr.mxu0 0.0
    %222 = vmatpush1.msra.mxu0 0.0
    %223 = vmatprep.subr.mxu0 0.0
    %224 = vmatpush1.msra.mxu0 0.0
    %225 = vmatprep.subr.mxu0 0.0
    %226 = vmatpush1.msra.mxu0 0.0
    %227 = vmatprep.subr.mxu0 0.0
    %228 = vmatpush1.msra.mxu0 0.0
    %229 = vmatprep.subr.mxu0 0.0
    %230 = vmatpush1.msra.mxu0 0.0
    %231 = vmatprep.subr.mxu0 0.0
    %232 = vmatpush1.msra.mxu0 0.0
    %233 = vmatprep.mubr.f32.mxu0 0.0
    %234 = vmatmul.mubr.f32.gmra.mrb[0].mxu0 %v146
    %v235 = vpop.f32.mrb[0].mxu0
    %v236 = vadd.f32 %v127, %v235
    %v237 = vpop.f32.mrb[0].mxu0
    %v238 = vadd.f32 %v131, %v237
    %239 = vmatprep.mubr.f32.mxu0 0.0
    %240 = vmatmul.mubr.f32.gmra.mrb[0].mxu0 %v149
    %v241 = vpop.f32.mrb[0].mxu0
    %v242 = vadd.f32 %v127, %v241
    %v243 = vpop.f32.mrb[0].mxu0
    %v244 = vadd.f32 %v131, %v243
    %245 = vmatprep.mubr.f32.mxu0 0.0
    %246 = vmatmul.mubr.f32.gmra.mrb[0].mxu0 %v152
    %v247 = vpop.f32.mrb[0].mxu0
    %v248 = vadd.f32 %v127, %v247
    %v249 = vpop.f32.mrb[0].mxu0
    %v250 = vadd.f32 %v131, %v249
    %251 = vmatprep.mubr.f32.mxu0 0.0
    %252 = vmatmul.mubr.f32.gmra.mrb[0].mxu0 %v155
    %v253 = vpop.f32.mrb[0].mxu0
    %v254 = vadd.f32 %v127, %v253
    %v255 = vpop.f32.mrb[0].mxu0
    %v256 = vadd.f32 %v131, %v255
    %257 = vmatprep.mubr.f32.mxu0 0.0
    %258 = vmatmul.mubr.f32.gmra.mrb[0].mxu0 %v158
    %v259 = vpop.f32.mrb[0].mxu0
    %v260 = vadd.f32 %v127, %v259
    %v261 = vpop.f32.mrb[0].mxu0
    %v262 = vadd.f32 %v131, %v261
    %263 = vmatprep.mubr.f32.mxu0 0.0
    %264 = vmatmul.mubr.f32.gmra.mrb[0].mxu0 %v161
    %v265 = vpop.f32.mrb[0].mxu0
    %v266 = vadd.f32 %v127, %v265
    %v267 = vpop.f32.mrb[0].mxu0
    %v268 = vadd.f32 %v131, %v267
    %269 = vmatprep.mubr.f32.mxu0 0.0
    %270 = vmatmul.mubr.f32.gmra.mrb[0].mxu0 %v164
    %v271 = vpop.f32.mrb[0].mxu0
    %v272 = vadd.f32 %v127, %v271
    %v273 = vpop.f32.mrb[0].mxu0
    %v274 = vadd.f32 %v131, %v273
    %275 = vmatprep.mubr.f32.mxu0 0.0
    %276 = vmatmul.mubr.f32.gmra.mrb[0].mxu0 %v167
    %v277 = vpop.f32.mrb[0].mxu0
    %v278 = vadd.f32 %v127, %v277
    %v279 = vpop.f32.mrb[0].mxu0
    %v280 = vadd.f32 %v131, %v279
    %281 = vdwg.mxu0
    %282 = vmatprep.subr.mxu0 %v121
    %283 = vmatpush1.msra.mxu0 %v120
    %284 = vmatprep.subr.mxu0 0.0
    %285 = vmatpush1.msra.mxu0 0.0
    %286 = vmatprep.subr.mxu0 0.0
    %287 = vmatpush1.msra.mxu0 0.0
    %288 = vmatprep.subr.mxu0 0.0
    %289 = vmatpush1.msra.mxu0 0.0
    %290 = vmatprep.subr.mxu0 0.0
    %291 = vmatpush1.msra.mxu0 0.0
    %292 = vmatprep.subr.mxu0 0.0
    %293 = vmatpush1.msra.mxu0 0.0
    %294 = vmatprep.subr.mxu0 0.0
    %295 = vmatpush1.msra.mxu0 0.0
    %296 = vmatprep.subr.mxu0 0.0
    %297 = vmatpush1.msra.mxu0 0.0
    %298 = vmatprep.subr.mxu0 0.0
    %299 = vmatpush1.msra.mxu0 0.0
    %300 = vmatprep.subr.mxu0 0.0
    %301 = vmatpush1.msra.mxu0 0.0
    %302 = vmatprep.subr.mxu0 0.0
    %303 = vmatpush1.msra.mxu0 0.0
    %304 = vmatprep.subr.mxu0 0.0
    %305 = vmatpush1.msra.mxu0 0.0
    %306 = vmatprep.subr.mxu0 0.0
    %307 = vmatpush1.msra.mxu0 0.0
    %308 = vmatprep.subr.mxu0 0.0
    %309 = vmatpush1.msra.mxu0 0.0
    %310 = vmatprep.subr.mxu0 0.0
    %311 = vmatpush1.msra.mxu0 0.0
    %312 = vmatprep.subr.mxu0 0.0
    %313 = vmatpush1.msra.mxu0 0.0
    %314 = vmatprep.subr.mxu0 0.0
    %315 = vmatpush1.msra.mxu0 0.0
    %316 = vmatprep.subr.mxu0 0.0
    %317 = vmatpush1.msra.mxu0 0.0
    %318 = vmatprep.subr.mxu0 0.0
    %319 = vmatpush1.msra.mxu0 0.0
    %320 = vmatprep.subr.mxu0 0.0
    %321 = vmatpush1.msra.mxu0 0.0
    %322 = vmatprep.subr.mxu0 0.0
    %323 = vmatpush1.msra.mxu0 0.0
    %324 = vmatprep.subr.mxu0 0.0
    %325 = vmatpush1.msra.mxu0 0.0
    %326 = vmatprep.subr.mxu0 0.0
    %327 = vmatpush1.msra.mxu0 0.0
    %328 = vmatprep.subr.mxu0 0.0
    %329 = vmatpush1.msra.mxu0 0.0
    %330 = vmatprep.subr.mxu0 0.0
    %331 = vmatpush1.msra.mxu0 0.0
    %332 = vmatprep.subr.mxu0 0.0
    %333 = vmatpush1.msra.mxu0 0.0
    %334 = vmatprep.subr.mxu0 0.0
    %335 = vmatpush1.msra.mxu0 0.0
    %336 = vmatprep.subr.mxu0 0.0
    %337 = vmatpush1.msra.mxu0 0.0
    %338 = vmatprep.subr.mxu0 0.0
    %339 = vmatpush1.msra.mxu0 0.0
    %340 = vmatprep.subr.mxu0 0.0
    %341 = vmatpush1.msra.mxu0 0.0
    %342 = vmatprep.subr.mxu0 0.0
    %343 = vmatpush1.msra.mxu0 0.0
    %344 = vmatprep.subr.mxu0 0.0
    %345 = vmatpush1.msra.mxu0 0.0
    %346 = vmatprep.mubr.f32.mxu0 0.0
    %347 = vmatmul.mubr.f32.gmra.mrb[0].mxu0 %v146
    %v348 = vpop.f32.mrb[0].mxu0
    %v349 = vadd.f32 %v135, %v348
    %v350 = vpop.f32.mrb[0].mxu0
    %v351 = vadd.f32 %v139, %v350
    %352 = vmatprep.mubr.f32.mxu0 0.0
    %353 = vmatmul.mubr.f32.gmra.mrb[0].mxu0 %v149
    %v354 = vpop.f32.mrb[0].mxu0
    %v355 = vadd.f32 %v135, %v354
    %v356 = vpop.f32.mrb[0].mxu0
    %v357 = vadd.f32 %v139, %v356
    %358 = vmatprep.mubr.f32.mxu0 0.0
    %359 = vmatmul.mubr.f32.gmra.mrb[0].mxu0 %v152
    %v360 = vpop.f32.mrb[0].mxu0
    %v361 = vadd.f32 %v135, %v360
    %v362 = vpop.f32.mrb[0].mxu0
    %v363 = vadd.f32 %v139, %v362
    %364 = vmatprep.mubr.f32.mxu0 0.0
    %365 = vmatmul.mubr.f32.gmra.mrb[0].mxu0 %v155
    %v366 = vpop.f32.mrb[0].mxu0
    %v367 = vadd.f32 %v135, %v366
    %v368 = vpop.f32.mrb[0].mxu0
    %v369 = vadd.f32 %v139, %v368
    %370 = vmatprep.mubr.f32.mxu0 0.0
    %371 = vmatmul.mubr.f32.gmra.mrb[0].mxu0 %v158
    %v372 = vpop.f32.mrb[0].mxu0
    %v373 = vadd.f32 %v135, %v372
    %v374 = vpop.f32.mrb[0].mxu0
    %v375 = vadd.f32 %v139, %v374
    %376 = vmatprep.mubr.f32.mxu0 0.0
    %377 = vmatmul.mubr.f32.gmra.mrb[0].mxu0 %v161
    %v378 = vpop.f32.mrb[0].mxu0
    %v379 = vadd.f32 %v135, %v378
    %v380 = vpop.f32.mrb[0].mxu0
    %v381 = vadd.f32 %v139, %v380
    %382 = vmatprep.mubr.f32.mxu0 0.0
    %383 = vmatmul.mubr.f32.gmra.mrb[0].mxu0 %v164
    %v384 = vpop.f32.mrb[0].mxu0
    %v385 = vadd.f32 %v135, %v384
    %v386 = vpop.f32.mrb[0].mxu0
    %v387 = vadd.f32 %v139, %v386
    %388 = vmatprep.mubr.f32.mxu0 0.0
    %389 = vmatmul.mubr.f32.gmra.mrb[0].mxu0 %v167
    %v390 = vpop.f32.mrb[0].mxu0
    %v391 = vadd.f32 %v135, %v390
    %v392 = vpop.f32.mrb[0].mxu0
    %v393 = vadd.f32 %v139, %v392
    %394 = vdwg.mxu0
    %395 = vst [vmem:[#allocation2] sm:$0xff] %v236
    %396 = vst [vmem:[#allocation2 + $0x8] sm:$0xff] %v238
    %397 = vst [vmem:[#allocation2 + $0x10] sm:$0xff] %v349
    %398 = vst [vmem:[#allocation2 + $0x18] sm:$0xff] %v351
    %399 = vst [vmem:[#allocation2 + $0x20] sm:$0xff] %v242
    %400 = vst [vmem:[#allocation2 + $0x28] sm:$0xff] %v244
    %401 = vst [vmem:[#allocation2 + $0x30] sm:$0xff] %v355
    %402 = vst [vmem:[#allocation2 + $0x38] sm:$0xff] %v357
    %403 = vst [vmem:[#allocation2 + $0x40] sm:$0xff] %v248
    %404 = vst [vmem:[#allocation2 + $0x48] sm:$0xff] %v250
    %405 = vst [vmem:[#allocation2 + $0x50] sm:$0xff] %v361
    %406 = vst [vmem:[#allocation2 + $0x58] sm:$0xff] %v363
    %407 = vst [vmem:[#allocation2 + $0x60] sm:$0xff] %v254
    %408 = vst [vmem:[#allocation2 + $0x68] sm:$0xff] %v256
    %409 = vst [vmem:[#allocation2 + $0x70] sm:$0xff] %v367
    %410 = vst [vmem:[#allocation2 + $0x78] sm:$0xff] %v369
    %411 = vst [vmem:[#allocation2 + $0x80] sm:$0xff] %v260
    %412 = vst [vmem:[#allocation2 + $0x88] sm:$0xff] %v262
    %413 = vst [vmem:[#allocation2 + $0x90] sm:$0xff] %v373
    %414 = vst [vmem:[#allocation2 + $0x98] sm:$0xff] %v375
    %415 = vst [vmem:[#allocation2 + $0xa0] sm:$0xff] %v266
    %416 = vst [vmem:[#allocation2 + $0xa8] sm:$0xff] %v268
    %417 = vst [vmem:[#allocation2 + $0xb0] sm:$0xff] %v379
    %418 = vst [vmem:[#allocation2 + $0xb8] sm:$0xff] %v381
    %419 = vst [vmem:[#allocation2 + $0xc0] sm:$0xff] %v272
    %420 = vst [vmem:[#allocation2 + $0xc8] sm:$0xff] %v274
    %421 = vst [vmem:[#allocation2 + $0xd0] sm:$0xff] %v385
    %422 = vst [vmem:[#allocation2 + $0xd8] sm:$0xff] %v387
    %423 = vst [vmem:[#allocation2 + $0xe0] sm:$0xff] %v278
    %424 = vst [vmem:[#allocation2 + $0xe8] sm:$0xff] %v280
    %425 = vst [vmem:[#allocation2 + $0xf0] sm:$0xff] %v391
    %426 = vst [vmem:[#allocation2 + $0xf8] sm:$0xff] %v393
    %v427 = vld [vmem:[#allocation12] sm:$0xff]
    %v428 = vld [vmem:[#allocation12 + $0x8] sm:$0xff]
    %v429 = vld [vmem:[#allocation12 + $0x10] sm:$0xff]
    %v430 = vld [vmem:[#allocation12 + $0x18] sm:$0xff]
    %v431 = vld [vmem:[#allocation12 + $0x20] sm:$0xff]
    %v432 = vld [vmem:[#allocation12 + $0x28] sm:$0xff]
    %v433 = vld [vmem:[#allocation12 + $0x30] sm:$0xff]
    %v434 = vld [vmem:[#allocation12 + $0x38] sm:$0xff]
    %v435 = vld [vmem:[#allocation12 + $0x40] sm:$0xff]
    %v436 = vld [vmem:[#allocation12 + $0x48] sm:$0xff]
    %v437 = vld [vmem:[#allocation12 + $0x50] sm:$0xff]
    %v438 = vld [vmem:[#allocation12 + $0x58] sm:$0xff]
    %v439 = vld [vmem:[#allocation12 + $0x60] sm:$0xff]
    %v440 = vld [vmem:[#allocation12 + $0x68] sm:$0xff]
    %v441 = vld [vmem:[#allocation12 + $0x70] sm:$0xff]
    %v442 = vld [vmem:[#allocation12 + $0x78] sm:$0xff]
    %v443 = vld [vmem:[#allocation12 + $0x80] sm:$0xff]
    %v444 = vld [vmem:[#allocation12 + $0x88] sm:$0xff]
    %v445 = vld [vmem:[#allocation12 + $0x90] sm:$0xff]
    %v446 = vld [vmem:[#allocation12 + $0x98] sm:$0xff]
    %v447 = vld [vmem:[#allocation12 + $0xa0] sm:$0xff]
    %v448 = vld [vmem:[#allocation12 + $0xa8] sm:$0xff]
    %v449 = vld [vmem:[#allocation12 + $0xb0] sm:$0xff]
    %v450 = vld [vmem:[#allocation12 + $0xb8] sm:$0xff]
    %v451 = vld [vmem:[#allocation12 + $0xc0] sm:$0xff]
    %v452 = vld [vmem:[#allocation12 + $0xc8] sm:$0xff]
    %v453 = vld [vmem:[#allocation12 + $0xd0] sm:$0xff]
    %v454 = vld [vmem:[#allocation12 + $0xd8] sm:$0xff]
    %v455 = vld [vmem:[#allocation12 + $0xe0] sm:$0xff]
    %v456 = vld [vmem:[#allocation12 + $0xe8] sm:$0xff]
    %v457 = vld [vmem:[#allocation12 + $0xf0] sm:$0xff]
    %v458 = vld [vmem:[#allocation12 + $0xf8] sm:$0xff]
    %v459 = vld [vmem:[#allocation12 + $0x100] sm:$0xff]
    %v460 = vld [vmem:[#allocation12 + $0x108] sm:$0xff]
    %v461 = vld [vmem:[#allocation12 + $0x110] sm:$0xff]
    %v462 = vld [vmem:[#allocation12 + $0x118] sm:$0xff]
    %v463 = vld [vmem:[#allocation12 + $0x120] sm:$0xff]
    %v464 = vld [vmem:[#allocation12 + $0x128] sm:$0xff]
    %v465 = vld [vmem:[#allocation12 + $0x130] sm:$0xff]
    %v466 = vld [vmem:[#allocation12 + $0x138] sm:$0xff]
    %v467 = vld [vmem:[#allocation12 + $0x140] sm:$0xff]
    %v468 = vld [vmem:[#allocation12 + $0x148] sm:$0xff]
    %v469 = vld [vmem:[#allocation12 + $0x150] sm:$0xff]
    %v470 = vld [vmem:[#allocation12 + $0x158] sm:$0xff]
    %v471 = vld [vmem:[#allocation12 + $0x160] sm:$0xff]
    %v472 = vld [vmem:[#allocation12 + $0x168] sm:$0xff]
    %v473 = vld [vmem:[#allocation12 + $0x170] sm:$0xff]
    %v474 = vld [vmem:[#allocation12 + $0x178] sm:$0xff]
    %v475 = vld [vmem:[#allocation12 + $0x180] sm:$0xff]
    %v476 = vld [vmem:[#allocation12 + $0x188] sm:$0xff]
    %v477 = vld [vmem:[#allocation12 + $0x190] sm:$0xff]
    %v478 = vld [vmem:[#allocation12 + $0x198] sm:$0xff]
    %v479 = vld [vmem:[#allocation12 + $0x1a0] sm:$0xff]
    %v480 = vld [vmem:[#allocation12 + $0x1a8] sm:$0xff]
    %v481 = vld [vmem:[#allocation12 + $0x1b0] sm:$0xff]
    %v482 = vld [vmem:[#allocation12 + $0x1b8] sm:$0xff]
    %v483 = vld [vmem:[#allocation12 + $0x1c0] sm:$0xff]
    %v484 = vld [vmem:[#allocation12 + $0x1c8] sm:$0xff]
    %v485 = vld [vmem:[#allocation12 + $0x1d0] sm:$0xff]
    %v486 = vld [vmem:[#allocation12 + $0x1d8] sm:$0xff]
    %v487 = vld [vmem:[#allocation12 + $0x1e0] sm:$0xff]
    %v488 = vld [vmem:[#allocation12 + $0x1e8] sm:$0xff]
    %v489 = vld [vmem:[#allocation12 + $0x1f0] sm:$0xff]
    %v490 = vld [vmem:[#allocation12 + $0x1f8] sm:$0xff]
    %v491 = vld [vmem:[#allocation7] sm:$0xff]
    %v492 = vld [vmem:[#allocation9] sm:$0xff]
    %s493 = smul.u32 0, 4
    %s494 = smul.addr %s493, 8
    %s495 = scalar_lea.vmem [#allocation2], %s494
    %v496 = vld [vmem:[%s495] sm:$0xff]
    %v497 = vld [vmem:[%s495 + $0x8] sm:$0xff]
    %v498 = vld [vmem:[%s495 + $0x10] sm:$0xff]
    %v499 = vld [vmem:[%s495 + $0x18] sm:$0xff]
    %500 = vmatprep.subr.mxu0 %v428
    %501 = vmatpush1.msra.mxu0 %v427
    %502 = vmatprep.subr.mxu0 %v432
    %503 = vmatpush1.msra.mxu0 %v431
    %504 = vmatprep.subr.mxu0 %v436
    %505 = vmatpush1.msra.mxu0 %v435
    %506 = vmatprep.subr.mxu0 %v440
    %507 = vmatpush1.msra.mxu0 %v439
    %508 = vmatprep.subr.mxu0 %v444
    %509 = vmatpush1.msra.mxu0 %v443
    %510 = vmatprep.subr.mxu0 %v448
    %511 = vmatpush1.msra.mxu0 %v447
    %512 = vmatprep.subr.mxu0 %v452
    %513 = vmatpush1.msra.mxu0 %v451
    %514 = vmatprep.subr.mxu0 %v456
    %515 = vmatpush1.msra.mxu0 %v455
    %516 = vmatprep.subr.mxu0 %v460
    %517 = vmatpush1.msra.mxu0 %v459
    %518 = vmatprep.subr.mxu0 %v464
    %519 = vmatpush1.msra.mxu0 %v463
    %520 = vmatprep.subr.mxu0 %v468
    %521 = vmatpush1.msra.mxu0 %v467
    %522 = vmatprep.subr.mxu0 %v472
    %523 = vmatpush1.msra.mxu0 %v471
    %524 = vmatprep.subr.mxu0 %v476
    %525 = vmatpush1.msra.mxu0 %v475
    %526 = vmatprep.subr.mxu0 %v480
    %527 = vmatpush1.msra.mxu0 %v479
    %528 = vmatprep.subr.mxu0 %v484
    %529 = vmatpush1.msra.mxu0 %v483
    %530 = vmatprep.subr.mxu0 %v488
    %531 = vmatpush1.msra.mxu0 %v487
    %532 = vmatprep.subr.mxu0 0.0
    %533 = vmatpush1.msra.mxu0 0.0
    %534 = vmatprep.subr.mxu0 0.0
    %535 = vmatpush1.msra.mxu0 0.0
    %536 = vmatprep.subr.mxu0 0.0
    %537 = vmatpush1.msra.mxu0 0.0
    %538 = vmatprep.subr.mxu0 0.0
    %539 = vmatpush1.msra.mxu0 0.0
    %540 = vmatprep.subr.mxu0 0.0
    %541 = vmatpush1.msra.mxu0 0.0
    %542 = vmatprep.subr.mxu0 0.0
    %543 = vmatpush1.msra.mxu0 0.0
    %544 = vmatprep.subr.mxu0 0.0
    %545 = vmatpush1.msra.mxu0 0.0
    %546 = vmatprep.subr.mxu0 0.0
    %547 = vmatpush1.msra.mxu0 0.0
    %548 = vmatprep.subr.mxu0 0.0
    %549 = vmatpush1.msra.mxu0 0.0
    %550 = vmatprep.subr.mxu0 0.0
    %551 = vmatpush1.msra.mxu0 0.0
    %552 = vmatprep.subr.mxu0 0.0
    %553 = vmatpush1.msra.mxu0 0.0
    %554 = vmatprep.subr.mxu0 0.0
    %555 = vmatpush1.msra.mxu0 0.0
    %556 = vmatprep.subr.mxu0 0.0
    %557 = vmatpush1.msra.mxu0 0.0
    %558 = vmatprep.subr.mxu0 0.0
    %559 = vmatpush1.msra.mxu0 0.0
    %560 = vmatprep.subr.mxu0 0.0
    %561 = vmatpush1.msra.mxu0 0.0
    %562 = vmatprep.subr.mxu0 0.0
    %563 = vmatpush1.msra.mxu0 0.0
    %564 = vmatprep.mubr.f32.mxu0 0.0
    %565 = vmatmul.mubr.f32.gmra.mrb[0].mxu0 %v491
    %v566 = vpop.f32.mrb[0].mxu0
    %v567 = vadd.f32 0.0, %v566
    %v568 = vpop.f32.mrb[0].mxu0
    %v569 = vadd.f32 0.0, %v568
    %570 = vdwg.mxu0
    %571 = vmatprep.subr.mxu0 %v430
    %572 = vmatpush1.msra.mxu0 %v429
    %573 = vmatprep.subr.mxu0 %v434
    %574 = vmatpush1.msra.mxu0 %v433
    %575 = vmatprep.subr.mxu0 %v438
    %576 = vmatpush1.msra.mxu0 %v437
    %577 = vmatprep.subr.mxu0 %v442
    %578 = vmatpush1.msra.mxu0 %v441
    %579 = vmatprep.subr.mxu0 %v446
    %580 = vmatpush1.msra.mxu0 %v445
    %581 = vmatprep.subr.mxu0 %v450
    %582 = vmatpush1.msra.mxu0 %v449
    %583 = vmatprep.subr.mxu0 %v454
    %584 = vmatpush1.msra.mxu0 %v453
    %585 = vmatprep.subr.mxu0 %v458
    %586 = vmatpush1.msra.mxu0 %v457
    %587 = vmatprep.subr.mxu0 %v462
    %588 = vmatpush1.msra.mxu0 %v461
    %589 = vmatprep.subr.mxu0 %v466
    %590 = vmatpush1.msra.mxu0 %v465
    %591 = vmatprep.subr.mxu0 %v470
    %592 = vmatpush1.msra.mxu0 %v469
    %593 = vmatprep.subr.mxu0 %v474
    %594 = vmatpush1.msra.mxu0 %v473
    %595 = vmatprep.subr.mxu0 %v478
    %596 = vmatpush1.msra.mxu0 %v477
    %597 = vmatprep.subr.mxu0 %v482
    %598 = vmatpush1.msra.mxu0 %v481
    %599 = vmatprep.subr.mxu0 %v486
    %600 = vmatpush1.msra.mxu0 %v485
    %601 = vmatprep.subr.mxu0 %v490
    %602 = vmatpush1.msra.mxu0 %v489
    %603 = vmatprep.subr.mxu0 0.0
    %604 = vmatpush1.msra.mxu0 0.0
    %605 = vmatprep.subr.mxu0 0.0
    %606 = vmatpush1.msra.mxu0 0.0
    %607 = vmatprep.subr.mxu0 0.0
    %608 = vmatpush1.msra.mxu0 0.0
    %609 = vmatprep.subr.mxu0 0.0
    %610 = vmatpush1.msra.mxu0 0.0
    %611 = vmatprep.subr.mxu0 0.0
    %612 = vmatpush1.msra.mxu0 0.0
    %613 = vmatprep.subr.mxu0 0.0
    %614 = vmatpush1.msra.mxu0 0.0
    %615 = vmatprep.subr.mxu0 0.0
    %616 = vmatpush1.msra.mxu0 0.0
    %617 = vmatprep.subr.mxu0 0.0
    %618 = vmatpush1.msra.mxu0 0.0
    %619 = vmatprep.subr.mxu0 0.0
    %620 = vmatpush1.msra.mxu0 0.0
    %621 = vmatprep.subr.mxu0 0.0
    %622 = vmatpush1.msra.mxu0 0.0
    %623 = vmatprep.subr.mxu0 0.0
    %624 = vmatpush1.msra.mxu0 0.0
    %625 = vmatprep.subr.mxu0 0.0
    %626 = vmatpush1.msra.mxu0 0.0
    %627 = vmatprep.subr.mxu0 0.0
    %628 = vmatpush1.msra.mxu0 0.0
    %629 = vmatprep.subr.mxu0 0.0
    %630 = vmatpush1.msra.mxu0 0.0
    %631 = vmatprep.subr.mxu0 0.0
    %632 = vmatpush1.msra.mxu0 0.0
    %633 = vmatprep.subr.mxu0 0.0
    %634 = vmatpush1.msra.mxu0 0.0
    %635 = vmatprep.mubr.f32.mxu0 0.0
    %636 = vmatmul.mubr.f32.gmra.mrb[0].mxu0 %v491
    %v637 = vpop.f32.mrb[0].mxu0
    %v638 = vadd.f32 0.0, %v637
    %v639 = vpop.f32.mrb[0].mxu0
    %v640 = vadd.f32 0.0, %v639
    %641 = vdwg.mxu0
    %v642 = vadd.f32 %v496, %v567
    %v643 = vadd.f32 %v497, %v569
    %v644 = vadd.f32 %v498, %v638
    %v645 = vadd.f32 %v499, %v640
    %v646 = vmul.f32 %v642, 0.5
    %v647 = vtanh.pop %v646
    %v648 = vmul.f32 %v647, 0.5
    %v649 = vadd.f32 %v648, 0.5
    %v650 = vmul.f32 %v643, 0.5
    %v651 = vtanh.pop %v650
    %v652 = vmul.f32 %v651, 0.5
    %v653 = vadd.f32 %v652, 0.5
    %v654 = vtanh.pop %v644
    %v655 = vmul.f32 %v645, 0.5
    %v656 = vtanh.pop %v655
    %v657 = vmul.f32 %v656, 0.5
    %v658 = vadd.f32 %v657, 0.5
    %v659 = vmul.f32 %v653, %v492
    %v660 = vmul.f32 %v649, %v654
    %v661 = vadd.f32 %v659, %v660
    %v662 = vtanh.pop %v661
    %v663 = vmul.f32 %v658, %v662
    %664 = vst [vmem:[#allocation3] sm:$0xff] %v663
    %s665 = smul.u32 1, 4
    %s666 = smul.addr %s665, 8
    %s667 = scalar_lea.vmem [#allocation2], %s666
    %v668 = vld [vmem:[%s667] sm:$0xff]
    %v669 = vld [vmem:[%s667 + $0x8] sm:$0xff]
    %v670 = vld [vmem:[%s667 + $0x10] sm:$0xff]
    %v671 = vld [vmem:[%s667 + $0x18] sm:$0xff]
    %672 = vmatprep.subr.mxu0 %v428
    %673 = vmatpush1.msra.mxu0 %v427
    %674 = vmatprep.subr.mxu0 %v432
    %675 = vmatpush1.msra.mxu0 %v431
    %676 = vmatprep.subr.mxu0 %v436
    %677 = vmatpush1.msra.mxu0 %v435
    %678 = vmatprep.subr.mxu0 %v440
    %679 = vmatpush1.msra.mxu0 %v439
    %680 = vmatprep.subr.mxu0 %v444
    %681 = vmatpush1.msra.mxu0 %v443
    %682 = vmatprep.subr.mxu0 %v448
    %683 = vmatpush1.msra.mxu0 %v447
    %684 = vmatprep.subr.mxu0 %v452
    %685 = vmatpush1.msra.mxu0 %v451
    %686 = vmatprep.subr.mxu0 %v456
    %687 = vmatpush1.msra.mxu0 %v455
    %688 = vmatprep.subr.mxu0 %v460
    %689 = vmatpush1.msra.mxu0 %v459
    %690 = vmatprep.subr.mxu0 %v464
    %691 = vmatpush1.msra.mxu0 %v463
    %692 = vmatprep.subr.mxu0 %v468
    %693 = vmatpush1.msra.mxu0 %v467
    %694 = vmatprep.subr.mxu0 %v472
    %695 = vmatpush1.msra.mxu0 %v471
    %696 = vmatprep.subr.mxu0 %v476
    %697 = vmatpush1.msra.mxu0 %v475
    %698 = vmatprep.subr.mxu0 %v480
    %699 = vmatpush1.msra.mxu0 %v479
    %700 = vmatprep.subr.mxu0 %v484
    %701 = vmatpush1.msra.mxu0 %v483
    %702 = vmatprep.subr.mxu0 %v488
    %703 = vmatpush1.msra.mxu0 %v487
    %704 = vmatprep.subr.mxu0 0.0
    %705 = vmatpush1.msra.mxu0 0.0
    %706 = vmatprep.subr.mxu0 0.0
    %707 = vmatpush1.msra.mxu0 0.0
    %708 = vmatprep.subr.mxu0 0.0
    %709 = vmatpush1.msra.mxu0 0.0
    %710 = vmatprep.subr.mxu0 0.0
    %711 = vmatpush1.msra.mxu0 0.0
    %712 = vmatprep.subr.mxu0 0.0
    %713 = vmatpush1.msra.mxu0 0.0
    %714 = vmatprep.subr.mxu0 0.0
    %715 = vmatpush1.msra.mxu0 0.0
    %716 = vmatprep.subr.mxu0 0.0
    %717 = vmatpush1.msra.mxu0 0.0
    %718 = vmatprep.subr.mxu0 0.0
    %719 = vmatpush1.msra.mxu0 0.0
    %720 = vmatprep.subr.mxu0 0.0
    %721 = vmatpush1.msra.mxu0 0.0
    %722 = vmatprep.subr.mxu0 0.0
    %723 = vmatpush1.msra.mxu0 0.0
    %724 = vmatprep.subr.mxu0 0.0
    %725 = vmatpush1.msra.mxu0 0.0
    %726 = vmatprep.subr.mxu0 0.0
    %727 = vmatpush1.msra.mxu0 0.0
    %728 = vmatprep.subr.mxu0 0.0
    %729 = vmatpush1.msra.mxu0 0.0
    %730 = vmatprep.subr.mxu0 0.0
    %731 = vmatpush1.msra.mxu0 0.0
    %732 = vmatprep.subr.mxu0 0.0
    %733 = vmatpush1.msra.mxu0 0.0
    %734 = vmatprep.subr.mxu0 0.0
    %735 = vmatpush1.msra.mxu0 0.0
    %736 = vmatprep.mubr.f32.mxu0 0.0
    %737 = vmatmul.mubr.f32.gmra.mrb[0].mxu0 %v663
    %v738 = vpop.f32.mrb[0].mxu0
    %v739 = vadd.f32 0.0, %v738
    %v740 = vpop.f32.mrb[0].mxu0
    %v741 = vadd.f32 0.0, %v740
    %742 = vdwg.mxu0
    %743 = vmatprep.subr.mxu0 %v430
    %744 = vmatpush1.msra.mxu0 %v429
    %745 = vmatprep.subr.mxu0 %v434
    %746 = vmatpush1.msra.mxu0 %v433
    %747 = vmatprep.subr.mxu0 %v438
    %748 = vmatpush1.msra.mxu0 %v437
    %749 = vmatprep.subr.mxu0 %v442
    %750 = vmatpush1.msra.mxu0 %v441
    %751 = vmatprep.subr.mxu0 %v446
    %752 = vmatpush1.msra.mxu0 %v445
    %753 = vmatprep.subr.mxu0 %v450
    %754 = vmatpush1.msra.mxu0 %v449
    %755 = vmatprep.subr.mxu0 %v454
    %756 = vmatpush1.msra.mxu0 %v453
    %757 = vmatprep.subr.mxu0 %v458
    %758 = vmatpush1.msra.mxu0 %v457
    %759 = vmatprep.subr.mxu0 %v462
    %760 = vmatpush1.msra.mxu0 %v461
    %761 = vmatprep.subr.mxu0 %v466
    %762 = vmatpush1.msra.mxu0 %v465
    %763 = vmatprep.subr.mxu0 %v470
    %764 = vmatpush1.msra.mxu0 %v469
    %765 = vmatprep.subr.mxu0 %v474
    %766 = vmatpush1.msra.mxu0 %v473
    %767 = vmatprep.subr.mxu0 %v478
    %768 = vmatpush1.msra.mxu0 %v477
    %769 = vmatprep.subr.mxu0 %v482
    %770 = vmatpush1.msra.mxu0 %v481
    %771 = vmatprep.subr.mxu0 %v486
    %772 = vmatpush1.msra.mxu0 %v485
    %773 = vmatprep.subr.mxu0 %v490
    %774 = vmatpush1.msra.mxu0 %v489
    %775 = vmatprep.subr.mxu0 0.0
    %776 = vmatpush1.msra.mxu0 0.0
    %777 = vmatprep.subr.mxu0 0.0
    %778 = vmatpush1.msra.mxu0 0.0
    %779 = vmatprep.subr.mxu0 0.0
    %780 = vmatpush1.msra.mxu0 0.0
    %781 = vmatprep.subr.mxu0 0.0
    %782 = vmatpush1.msra.mxu0 0.0
    %783 = vmatprep.subr.mxu0 0.0
    %784 = vmatpush1.msra.mxu0 0.0
    %785 = vmatprep.subr.mxu0 0.0
    %786 = vmatpush1.msra.mxu0 0.0
    %787 = vmatprep.subr.mxu0 0.0
    %788 = vmatpush1.msra.mxu0 0.0
    %789 = vmatprep.subr.mxu0 0.0
    %790 = vmatpush1.msra.mxu0 0.0
    %791 = vmatprep.subr.mxu0 0.0
    %792 = vmatpush1.msra.mxu0 0.0
    %793 = vmatprep.subr.mxu0 0.0
    %794 = vmatpush1.msra.mxu0 0.0
    %795 = vmatprep.subr.mxu0 0.0
    %796 = vmatpush1.msra.mxu0 0.0
    %797 = vmatprep.subr.mxu0 0.0
    %798 = vmatpush1.msra.mxu0 0.0
    %799 = vmatprep.subr.mxu0 0.0
    %800 = vmatpush1.msra.mxu0 0.0
    %801 = vmatprep.subr.mxu0 0.0
    %802 = vmatpush1.msra.mxu0 0.0
    %803 = vmatprep.subr.mxu0 0.0
    %804 = vmatpush1.msra.mxu0 0.0
    %805 = vmatprep.subr.mxu0 0.0
    %806 = vmatpush1.msra.mxu0 0.0
    %807 = vmatprep.mubr.f32.mxu0 0.0
    %808 = vmatmul.mubr.f32.gmra.mrb[0].mxu0 %v663
    %v809 = vpop.f32.mrb[0].mxu0
    %v810 = vadd.f32 0.0, %v809
    %v811 = vpop.f32.mrb[0].mxu0
    %v812 = vadd.f32 0.0, %v811
    %813 = vdwg.mxu0
    %v814 = vadd.f32 %v668, %v739
    %v815 = vadd.f32 %v669, %v741
    %v816 = vadd.f32 %v670, %v810
    %v817 = vadd.f32 %v671, %v812
    %v818 = vmul.f32 %v814, 0.5
    %v819 = vtanh.pop %v818
    %v820 = vmul.f32 %v819, 0.5
    %v821 = vadd.f32 %v820, 0.5
    %v822 = vmul.f32 %v815, 0.5
    %v823 = vtanh.pop %v822
    %v824 = vmul.f32 %v823, 0.5
    %v825 = vadd.f32 %v824, 0.5
    %v826 = vtanh.pop %v816
    %v827 = vmul.f32 %v817, 0.5
    %v828 = vtanh.pop %v827
    %v829 = vmul.f32 %v828, 0.5
    %v830 = vadd.f32 %v829, 0.5
    %v831 = vmul.f32 %v825, %v661
    %v832 = vmul.f32 %v821, %v826
    %v833 = vadd.f32 %v831, %v832
    %v834 = vtanh.pop %v833
    %v835 = vmul.f32 %v830, %v834
    %s836 = scalar_lea.vmem [#allocation3], 8
    %837 = vst [vmem:[%s836] sm:$0xff] %v835
    %s838 = smul.u32 2, 4
    %s839 = smul.addr %s838, 8
    %s840 = scalar_lea.vmem [#allocation2], %s839
    %v841 = vld [vmem:[%s840] sm:$0xff]
    %v842 = vld [vmem:[%s840 + $0x8] sm:$0xff]
    %v843 = vld [vmem:[%s840 + $0x10] sm:$0xff]
    %v844 = vld [vmem:[%s840 + $0x18] sm:$0xff]
    %845 = vmatprep.subr.mxu0 %v428
    %846 = vmatpush1.msra.mxu0 %v427
    %847 = vmatprep.subr.mxu0 %v432
    %848 = vmatpush1.msra.mxu0 %v431
    %849 = vmatprep.subr.mxu0 %v436
    %850 = vmatpush1.msra.mxu0 %v435
    %851 = vmatprep.subr.mxu0 %v440
    %852 = vmatpush1.msra.mxu0 %v439
    %853 = vmatprep.subr.mxu0 %v444
    %854 = vmatpush1.msra.mxu0 %v443
    %855 = vmatprep.subr.mxu0 %v448
    %856 = vmatpush1.msra.mxu0 %v447
    %857 = vmatprep.subr.mxu0 %v452
    %858 = vmatpush1.msra.mxu0 %v451
    %859 = vmatprep.subr.mxu0 %v456
    %860 = vmatpush1.msra.mxu0 %v455
    %861 = vmatprep.subr.mxu0 %v460
    %862 = vmatpush1.msra.mxu0 %v459
    %863 = vmatprep.subr.mxu0 %v464
    %864 = vmatpush1.msra.mxu0 %v463
    %865 = vmatprep.subr.mxu0 %v468
    %866 = vmatpush1.msra.mxu0 %v467
    %867 = vmatprep.subr.mxu0 %v472
    %868 = vmatpush1.msra.mxu0 %v471
    %869 = vmatprep.subr.mxu0 %v476
    %870 = vmatpush1.msra.mxu0 %v475
    %871 = vmatprep.subr.mxu0 %v480
    %872 = vmatpush1.msra.mxu0 %v479
    %873 = vmatprep.subr.mxu0 %v484
    %874 = vmatpush1.msra.mxu0 %v483
    %875 = vmatprep.subr.mxu0 %v488
    %876 = vmatpush1.msra.mxu0 %v487
    %877 = vmatprep.subr.mxu0 0.0
    %878 = vmatpush1.msra.mxu0 0.0
    %879 = vmatprep.subr.mxu0 0.0
    %880 = vmatpush1.msra.mxu0 0.0
    %881 = vmatprep.subr.mxu0 0.0
    %882 = vmatpush1.msra.mxu0 0.0
    %883 = vmatprep.subr.mxu0 0.0
    %884 = vmatpush1.msra.mxu0 0.0
    %885 = vmatprep.subr.mxu0 0.0
    %886 = vmatpush1.msra.mxu0 0.0
    %887 = vmatprep.subr.mxu0 0.0
    %888 = vmatpush1.msra.mxu0 0.0
    %889 = vmatprep.subr.mxu0 0.0
    %890 = vmatpush1.msra.mxu0 0.0
    %891 = vmatprep.subr.mxu0 0.0
    %892 = vmatpush1.msra.mxu0 0.0
    %893 = vmatprep.subr.mxu0 0.0
    %894 = vmatpush1.msra.mxu0 0.0
    %895 = vmatprep.subr.mxu0 0.0
    %896 = vmatpush1.msra.mxu0 0.0
    %897 = vmatprep.subr.mxu0 0.0
    %898 = vmatpush1.msra.mxu0 0.0
    %899 = vmatprep.subr.mxu0 0.0
    %900 = vmatpush1.msra.mxu0 0.0
    %901 = vmatprep.subr.mxu0 0.0
    %902 = vmatpush1.msra.mxu0 0.0
    %903 = vmatprep.subr.mxu0 0.0
    %904 = vmatpush1.msra.mxu0 0.0
    %905 = vmatprep.subr.mxu0 0.0
    %906 = vmatpush1.msra.mxu0 0.0
    %907 = vmatprep.subr.mxu0 0.0
    %908 = vmatpush1.msra.mxu0 0.0
    %909 = vmatprep.mubr.f32.mxu0 0.0
    %910 = vmatmul.mubr.f32.gmra.mrb[0].mxu0 %v835
    %v911 = vpop.f32.mrb[0].mxu0
    %v912 = vadd.f32 0.0, %v911
    %v913 = vpop.f32.mrb[0].mxu0
    %v914 = vadd.f32 0.0, %v913
    %915 = vdwg.mxu0
    %916 = vmatprep.subr.mxu0 %v430
    %917 = vmatpush1.msra.mxu0 %v429
    %918 = vmatprep.subr.mxu0 %v434
    %919 = vmatpush1.msra.mxu0 %v433
    %920 = vmatprep.subr.mxu0 %v438
    %921 = vmatpush1.msra.mxu0 %v437
    %922 = vmatprep.subr.mxu0 %v442
    %923 = vmatpush1.msra.mxu0 %v441
    %924 = vmatprep.subr.mxu0 %v446
    %925 = vmatpush1.msra.mxu0 %v445
    %926 = vmatprep.subr.mxu0 %v450
    %927 = vmatpush1.msra.mxu0 %v449
    %928 = vmatprep.subr.mxu0 %v454
    %929 = vmatpush1.msra.mxu0 %v453
    %930 = vmatprep.subr.mxu0 %v458
    %931 = vmatpush1.msra.mxu0 %v457
    %932 = vmatprep.subr.mxu0 %v462
    %933 = vmatpush1.msra.mxu0 %v461
    %934 = vmatprep.subr.mxu0 %v466
    %935 = vmatpush1.msra.mxu0 %v465
    %936 = vmatprep.subr.mxu0 %v470
    %937 = vmatpush1.msra.mxu0 %v469
    %938 = vmatprep.subr.mxu0 %v474
    %939 = vmatpush1.msra.mxu0 %v473
    %940 = vmatprep.subr.mxu0 %v478
    %941 = vmatpush1.msra.mxu0 %v477
    %942 = vmatprep.subr.mxu0 %v482
    %943 = vmatpush1.msra.mxu0 %v481
    %944 = vmatprep.subr.mxu0 %v486
    %945 = vmatpush1.msra.mxu0 %v485
    %946 = vmatprep.subr.mxu0 %v490
    %947 = vmatpush1.msra.mxu0 %v489
    %948 = vmatprep.subr.mxu0 0.0
    %949 = vmatpush1.msra.mxu0 0.0
    %950 = vmatprep.subr.mxu0 0.0
    %951 = vmatpush1.msra.mxu0 0.0
    %952 = vmatprep.subr.mxu0 0.0
    %953 = vmatpush1.msra.mxu0 0.0
    %954 = vmatprep.subr.mxu0 0.0
    %955 = vmatpush1.msra.mxu0 0.0
    %956 = vmatprep.subr.mxu0 0.0
    %957 = vmatpush1.msra.mxu0 0.0
    %958 = vmatprep.subr.mxu0 0.0
    %959 = vmatpush1.msra.mxu0 0.0
    %960 = vmatprep.subr.mxu0 0.0
    %961 = vmatpush1.msra.mxu0 0.0
    %962 = vmatprep.subr.mxu0 0.0
    %963 = vmatpush1.msra.mxu0 0.0
    %964 = vmatprep.subr.mxu0 0.0
    %965 = vmatpush1.msra.mxu0 0.0
    %966 = vmatprep.subr.mxu0 0.0
    %967 = vmatpush1.msra.mxu0 0.0
    %968 = vmatprep.subr.mxu0 0.0
    %969 = vmatpush1.msra.mxu0 0.0
    %970 = vmatprep.subr.mxu0 0.0
    %971 = vmatpush1.msra.mxu0 0.0
    %972 = vmatprep.subr.mxu0 0.0
    %973 = vmatpush1.msra.mxu0 0.0
    %974 = vmatprep.subr.mxu0 0.0
    %975 = vmatpush1.msra.mxu0 0.0
    %976 = vmatprep.subr.mxu0 0.0
    %977 = vmatpush1.msra.mxu0 0.0
    %978 = vmatprep.subr.mxu0 0.0
    %979 = vmatpush1.msra.mxu0 0.0
    %980 = vmatprep.mubr.f32.mxu0 0.0
    %981 = vmatmul.mubr.f32.gmra.mrb[0].mxu0 %v835
    %v982 = vpop.f32.mrb[0].mxu0
    %v983 = vadd.f32 0.0, %v982
    %v984 = vpop.f32.mrb[0].mxu0
    %v985 = vadd.f32 0.0, %v984
    %986 = vdwg.mxu0
    %v987 = vadd.f32 %v841, %v912
    %v988 = vadd.f32 %v842, %v914
    %v989 = vadd.f32 %v843, %v983
    %v990 = vadd.f32 %v844, %v985
    %v991 = vmul.f32 %v987, 0.5
    %v992 = vtanh.pop %v991
    %v993 = vmul.f32 %v992, 0.5
    %v994 = vadd.f32 %v993, 0.5
    %v995 = vmul.f32 %v988, 0.5
    %v996 = vtanh.pop %v995
    %v997 = vmul.f32 %v996, 0.5
    %v998 = vadd.f32 %v997, 0.5
    %v999 = vtanh.pop %v989
    %v1000 = vmul.f32 %v990, 0.5
    %v1001 = vtanh.pop %v1000
    %v1002 = vmul.f32 %v1001, 0.5
    %v1003 = vadd.f32 %v1002, 0.5
    %v1004 = vmul.f32 %v998, %v833
    %v1005 = vmul.f32 %v994, %v999
    %v1006 = vadd.f32 %v1004, %v1005
    %v1007 = vtanh.pop %v1006
    %v1008 = vmul.f32 %v1003, %v1007
    %s1009 = scalar_lea.vmem [#allocation3], 16
    %1010 = vst [vmem:[%s1009] sm:$0xff] %v1008
    %s1011 = smul.u32 3, 4
    %s1012 = smul.addr %s1011, 8
    %s1013 = scalar_lea.vmem [#allocation2], %s1012
    %v1014 = vld [vmem:[%s1013] sm:$0xff]
    %v1015 = vld [vmem:[%s1013 + $0x8] sm:$0xff]
    %v1016 = vld [vmem:[%s1013 + $0x10] sm:$0xff]
    %v1017 = vld [vmem:[%s1013 + $0x18] sm:$0xff]
    %1018 = vmatprep.subr.mxu0 %v428
    %1019 = vmatpush1.msra.mxu0 %v427
    %1020 = vmatprep.subr.mxu0 %v432
    %1021 = vmatpush1.msra.mxu0 %v431
    %1022 = vmatprep.subr.mxu0 %v436
    %1023 = vmatpush1.msra.mxu0 %v435
    %1024 = vmatprep.subr.mxu0 %v440
    %1025 = vmatpush1.msra.mxu0 %v439
    %1026 = vmatprep.subr.mxu0 %v444
    %1027 = vmatpush1.msra.mxu0 %v443
    %1028 = vmatprep.subr.mxu0 %v448
    %1029 = vmatpush1.msra.mxu0 %v447
    %1030 = vmatprep.subr.mxu0 %v452
    %1031 = vmatpush1.msra.mxu0 %v451
    %1032 = vmatprep.subr.mxu0 %v456
    %1033 = vmatpush1.msra.mxu0 %v455
    %1034 = vmatprep.subr.mxu0 %v460
    %1035 = vmatpush1.msra.mxu0 %v459
    %1036 = vmatprep.subr.mxu0 %v464
    %1037 = vmatpush1.msra.mxu0 %v463
    %1038 = vmatprep.subr.mxu0 %v468
    %1039 = vmatpush1.msra.mxu0 %v467
    %1040 = vmatprep.subr.mxu0 %v472
    %1041 = vmatpush1.msra.mxu0 %v471
    %1042 = vmatprep.subr.mxu0 %v476
    %1043 = vmatpush1.msra.mxu0 %v475
    %1044 = vmatprep.subr.mxu0 %v480
    %1045 = vmatpush1.msra.mxu0 %v479
    %1046 = vmatprep.subr.mxu0 %v484
    %1047 = vmatpush1.msra.mxu0 %v483
    %1048 = vmatprep.subr.mxu0 %v488
    %1049 = vmatpush1.msra.mxu0 %v487
    %1050 = vmatprep.subr.mxu0 0.0
    %1051 = vmatpush1.msra.mxu0 0.0
    %1052 = vmatprep.subr.mxu0 0.0
    %1053 = vmatpush1.msra.mxu0 0.0
    %1054 = vmatprep.subr.mxu0 0.0
    %1055 = vmatpush1.msra.mxu0 0.0
    %1056 = vmatprep.subr.mxu0 0.0
    %1057 = vmatpush1.msra.mxu0 0.0
    %1058 = vmatprep.subr.mxu0 0.0
    %1059 = vmatpush1.msra.mxu0 0.0
    %1060 = vmatprep.subr.mxu0 0.0
    %1061 = vmatpush1.msra.mxu0 0.0
    %1062 = vmatprep.subr.mxu0 0.0
    %1063 = vmatpush1.msra.mxu0 0.0
    %1064 = vmatprep.subr.mxu0 0.0
    %1065 = vmatpush1.msra.mxu0 0.0
    %1066 = vmatprep.subr.mxu0 0.0
    %1067 = vmatpush1.msra.mxu0 0.0
    %1068 = vmatprep.subr.mxu0 0.0
    %1069 = vmatpush1.msra.mxu0 0.0
    %1070 = vmatprep.subr.mxu0 0.0
    %1071 = vmatpush1.msra.mxu0 0.0
    %1072 = vmatprep.subr.mxu0 0.0
    %1073 = vmatpush1.msra.mxu0 0.0
    %1074 = vmatprep.subr.mxu0 0.0
    %1075 = vmatpush1.msra.mxu0 0.0
    %1076 = vmatprep.subr.mxu0 0.0
    %1077 = vmatpush1.msra.mxu0 0.0
    %1078 = vmatprep.subr.mxu0 0.0
    %1079 = vmatpush1.msra.mxu0 0.0
    %1080 = vmatprep.subr.mxu0 0.0
    %1081 = vmatpush1.msra.mxu0 0.0
    %1082 = vmatprep.mubr.f32.mxu0 0.0
    %1083 = vmatmul.mubr.f32.gmra.mrb[0].mxu0 %v1008
    %v1084 = vpop.f32.mrb[0].mxu0
    %v1085 = vadd.f32 0.0, %v1084
    %v1086 = vpop.f32.mrb[0].mxu0
    %v1087 = vadd.f32 0.0, %v1086
    %1088 = vdwg.mxu0
    %1089 = vmatprep.subr.mxu0 %v430
    %1090 = vmatpush1.msra.mxu0 %v429
    %1091 = vmatprep.subr.mxu0 %v434
    %1092 = vmatpush1.msra.mxu0 %v433
    %1093 = vmatprep.subr.mxu0 %v438
    %1094 = vmatpush1.msra.mxu0 %v437
    %1095 = vmatprep.subr.mxu0 %v442
    %1096 = vmatpush1.msra.mxu0 %v441
    %1097 = vmatprep.subr.mxu0 %v446
    %1098 = vmatpush1.msra.mxu0 %v445
    %1099 = vmatprep.subr.mxu0 %v450
    %1100 = vmatpush1.msra.mxu0 %v449
    %1101 = vmatprep.subr.mxu0 %v454
    %1102 = vmatpush1.msra.mxu0 %v453
    %1103 = vmatprep.subr.mxu0 %v458
    %1104 = vmatpush1.msra.mxu0 %v457
    %1105 = vmatprep.subr.mxu0 %v462
    %1106 = vmatpush1.msra.mxu0 %v461
    %1107 = vmatprep.subr.mxu0 %v466
    %1108 = vmatpush1.msra.mxu0 %v465
    %1109 = vmatprep.subr.mxu0 %v470
    %1110 = vmatpush1.msra.mxu0 %v469
    %1111 = vmatprep.subr.mxu0 %v474
    %1112 = vmatpush1.msra.mxu0 %v473
    %1113 = vmatprep.subr.mxu0 %v478
    %1114 = vmatpush1.msra.mxu0 %v477
    %1115 = vmatprep.subr.mxu0 %v482
    %1116 = vmatpush1.msra.mxu0 %v481
    %1117 = vmatprep.subr.mxu0 %v486
    %1118 = vmatpush1.msra.mxu0 %v485
    %1119 = vmatprep.subr.mxu0 %v490
    %1120 = vmatpush1.msra.mxu0 %v489
    %1121 = vmatprep.subr.mxu0 0.0
    %1122 = vmatpush1.msra.mxu0 0.0
    %1123 = vmatprep.subr.mxu0 0.0
    %1124 = vmatpush1.msra.mxu0 0.0
    %1125 = vmatprep.subr.mxu0 0.0
    %1126 = vmatpush1.msra.mxu0 0.0
    %1127 = vmatprep.subr.mxu0 0.0
    %1128 = vmatpush1.msra.mxu0 0.0
    %1129 = vmatprep.subr.mxu0 0.0
    %1130 = vmatpush1.msra.mxu0 0.0
    %1131 = vmatprep.subr.mxu0 0.0
    %1132 = vmatpush1.msra.mxu0 0.0
    %1133 = vmatprep.subr.mxu0 0.0
    %1134 = vmatpush1.msra.mxu0 0.0
    %1135 = vmatprep.subr.mxu0 0.0
    %1136 = vmatpush1.msra.mxu0 0.0
    %1137 = vmatprep.subr.mxu0 0.0
    %1138 = vmatpush1.msra.mxu0 0.0
    %1139 = vmatprep.subr.mxu0 0.0
    %1140 = vmatpush1.msra.mxu0 0.0
    %1141 = vmatprep.subr.mxu0 0.0
    %1142 = vmatpush1.msra.mxu0 0.0
    %1143 = vmatprep.subr.mxu0 0.0
    %1144 = vmatpush1.msra.mxu0 0.0
    %1145 = vmatprep.subr.mxu0 0.0
    %1146 = vmatpush1.msra.mxu0 0.0
    %1147 = vmatprep.subr.mxu0 0.0
    %1148 = vmatpush1.msra.mxu0 0.0
    %1149 = vmatprep.subr.mxu0 0.0
    %1150 = vmatpush1.msra.mxu0 0.0
    %1151 = vmatprep.subr.mxu0 0.0
    %1152 = vmatpush1.msra.mxu0 0.0
    %1153 = vmatprep.mubr.f32.mxu0 0.0
    %1154 = vmatmul.mubr.f32.gmra.mrb[0].mxu0 %v1008
    %v1155 = vpop.f32.mrb[0].mxu0
    %v1156 = vadd.f32 0.0, %v1155
    %v1157 = vpop.f32.mrb[0].mxu0
    %v1158 = vadd.f32 0.0, %v1157
    %1159 = vdwg.mxu0
    %v1160 = vadd.f32 %v1014, %v1085
    %v1161 = vadd.f32 %v1015, %v1087
    %v1162 = vadd.f32 %v1016, %v1156
    %v1163 = vadd.f32 %v1017, %v1158
    %v1164 = vmul.f32 %v1160, 0.5
    %v1165 = vtanh.pop %v1164
    %v1166 = vmul.f32 %v1165, 0.5
    %v1167 = vadd.f32 %v1166, 0.5
    %v1168 = vmul.f32 %v1161, 0.5
    %v1169 = vtanh.pop %v1168
    %v1170 = vmul.f32 %v1169, 0.5
    %v1171 = vadd.f32 %v1170, 0.5
    %v1172 = vtanh.pop %v1162
    %v1173 = vmul.f32 %v1163, 0.5
    %v1174 = vtanh.pop %v1173
    %v1175 = vmul.f32 %v1174, 0.5
    %v1176 = vadd.f32 %v1175, 0.5
    %v1177 = vmul.f32 %v1171, %v1006
    %v1178 = vmul.f32 %v1167, %v1172
    %v1179 = vadd.f32 %v1177, %v1178
    %v1180 = vtanh.pop %v1179
    %v1181 = vmul.f32 %v1176, %v1180
    %s1182 = scalar_lea.vmem [#allocation3], 24
    %1183 = vst [vmem:[%s1182] sm:$0xff] %v1181
    %s1184 = smul.u32 4, 4
    %s1185 = smul.addr %s1184, 8
    %s1186 = scalar_lea.vmem [#allocation2], %s1185
    %v1187 = vld [vmem:[%s1186] sm:$0xff]
    %v1188 = vld [vmem:[%s1186 + $0x8] sm:$0xff]
    %v1189 = vld [vmem:[%s1186 + $0x10] sm:$0xff]
    %v1190 = vld [vmem:[%s1186 + $0x18] sm:$0xff]
    %1191 = vmatprep.subr.mxu0 %v428
    %1192 = vmatpush1.msra.mxu0 %v427
    %1193 = vmatprep.subr.mxu0 %v432
    %1194 = vmatpush1.msra.mxu0 %v431
    %1195 = vmatprep.subr.mxu0 %v436
    %1196 = vmatpush1.msra.mxu0 %v435
    %1197 = vmatprep.subr.mxu0 %v440
    %1198 = vmatpush1.msra.mxu0 %v439
    %1199 = vmatprep.subr.mxu0 %v444
    %1200 = vmatpush1.msra.mxu0 %v443
    %1201 = vmatprep.subr.mxu0 %v448
    %1202 = vmatpush1.msra.mxu0 %v447
    %1203 = vmatprep.subr.mxu0 %v452
    %1204 = vmatpush1.msra.mxu0 %v451
    %1205 = vmatprep.subr.mxu0 %v456
    %1206 = vmatpush1.msra.mxu0 %v455
    %1207 = vmatprep.subr.mxu0 %v460
    %1208 = vmatpush1.msra.mxu0 %v459
    %1209 = vmatprep.subr.mxu0 %v464
    %1210 = vmatpush1.msra.mxu0 %v463
    %1211 = vmatprep.subr.mxu0 %v468
    %1212 = vmatpush1.msra.mxu0 %v467
    %1213 = vmatprep.subr.mxu0 %v472
    %1214 = vmatpush1.msra.mxu0 %v471
    %1215 = vmatprep.subr.mxu0 %v476
    %1216 = vmatpush1.msra.mxu0 %v475
    %1217 = vmatprep.subr.mxu0 %v480
    %1218 = vmatpush1.msra.mxu0 %v479
    %1219 = vmatprep.subr.mxu0 %v484
    %1220 = vmatpush1.msra.mxu0 %v483
    %1221 = vmatprep.subr.mxu0 %v488
    %1222 = vmatpush1.msra.mxu0 %v487
    %1223 = vmatprep.subr.mxu0 0.0
    %1224 = vmatpush1.msra.mxu0 0.0
    %1225 = vmatprep.subr.mxu0 0.0
    %1226 = vmatpush1.msra.mxu0 0.0
    %1227 = vmatprep.subr.mxu0 0.0
    %1228 = vmatpush1.msra.mxu0 0.0
    %1229 = vmatprep.subr.mxu0 0.0
    %1230 = vmatpush1.msra.mxu0 0.0
    %1231 = vmatprep.subr.mxu0 0.0
    %1232 = vmatpush1.msra.mxu0 0.0
    %1233 = vmatprep.subr.mxu0 0.0
    %1234 = vmatpush1.msra.mxu0 0.0
    %1235 = vmatprep.subr.mxu0 0.0
    %1236 = vmatpush1.msra.mxu0 0.0
    %1237 = vmatprep.subr.mxu0 0.0
    %1238 = vmatpush1.msra.mxu0 0.0
    %1239 = vmatprep.subr.mxu0 0.0
    %1240 = vmatpush1.msra.mxu0 0.0
    %1241 = vmatprep.subr.mxu0 0.0
    %1242 = vmatpush1.msra.mxu0 0.0
    %1243 = vmatprep.subr.mxu0 0.0
    %1244 = vmatpush1.msra.mxu0 0.0
    %1245 = vmatprep.subr.mxu0 0.0
    %1246 = vmatpush1.msra.mxu0 0.0
    %1247 = vmatprep.subr.mxu0 0.0
    %1248 = vmatpush1.msra.mxu0 0.0
    %1249 = vmatprep.subr.mxu0 0.0
    %1250 = vmatpush1.msra.mxu0 0.0
    %1251 = vmatprep.subr.mxu0 0.0
    %1252 = vmatpush1.msra.mxu0 0.0
    %1253 = vmatprep.subr.mxu0 0.0
    %1254 = vmatpush1.msra.mxu0 0.0
    %1255 = vmatprep.mubr.f32.mxu0 0.0
    %1256 = vmatmul.mubr.f32.gmra.mrb[0].mxu0 %v1181
    %v1257 = vpop.f32.mrb[0].mxu0
    %v1258 = vadd.f32 0.0, %v1257
    %v1259 = vpop.f32.mrb[0].mxu0
    %v1260 = vadd.f32 0.0, %v1259
    %1261 = vdwg.mxu0
    %1262 = vmatprep.subr.mxu0 %v430
    %1263 = vmatpush1.msra.mxu0 %v429
    %1264 = vmatprep.subr.mxu0 %v434
    %1265 = vmatpush1.msra.mxu0 %v433
    %1266 = vmatprep.subr.mxu0 %v438
    %1267 = vmatpush1.msra.mxu0 %v437
    %1268 = vmatprep.subr.mxu0 %v442
    %1269 = vmatpush1.msra.mxu0 %v441
    %1270 = vmatprep.subr.mxu0 %v446
    %1271 = vmatpush1.msra.mxu0 %v445
    %1272 = vmatprep.subr.mxu0 %v450
    %1273 = vmatpush1.msra.mxu0 %v449
    %1274 = vmatprep.subr.mxu0 %v454
    %1275 = vmatpush1.msra.mxu0 %v453
    %1276 = vmatprep.subr.mxu0 %v458
    %1277 = vmatpush1.msra.mxu0 %v457
    %1278 = vmatprep.subr.mxu0 %v462
    %1279 = vmatpush1.msra.mxu0 %v461
    %1280 = vmatprep.subr.mxu0 %v466
    %1281 = vmatpush1.msra.mxu0 %v465
    %1282 = vmatprep.subr.mxu0 %v470
    %1283 = vmatpush1.msra.mxu0 %v469
    %1284 = vmatprep.subr.mxu0 %v474
    %1285 = vmatpush1.msra.mxu0 %v473
    %1286 = vmatprep.subr.mxu0 %v478
    %1287 = vmatpush1.msra.mxu0 %v477
    %1288 = vmatprep.subr.mxu0 %v482
    %1289 = vmatpush1.msra.mxu0 %v481
    %1290 = vmatprep.subr.mxu0 %v486
    %1291 = vmatpush1.msra.mxu0 %v485
    %1292 = vmatprep.subr.mxu0 %v490
    %1293 = vmatpush1.msra.mxu0 %v489
    %1294 = vmatprep.subr.mxu0 0.0
    %1295 = vmatpush1.msra.mxu0 0.0
    %1296 = vmatprep.subr.mxu0 0.0
    %1297 = vmatpush1.msra.mxu0 0.0
    %1298 = vmatprep.subr.mxu0 0.0
    %1299 = vmatpush1.msra.mxu0 0.0
    %1300 = vmatprep.subr.mxu0 0.0
    %1301 = vmatpush1.msra.mxu0 0.0
    %1302 = vmatprep.subr.mxu0 0.0
    %1303 = vmatpush1.msra.mxu0 0.0
    %1304 = vmatprep.subr.mxu0 0.0
    %1305 = vmatpush1.msra.mxu0 0.0
    %1306 = vmatprep.subr.mxu0 0.0
    %1307 = vmatpush1.msra.mxu0 0.0
    %1308 = vmatprep.subr.mxu0 0.0
    %1309 = vmatpush1.msra.mxu0 0.0
    %1310 = vmatprep.subr.mxu0 0.0
    %1311 = vmatpush1.msra.mxu0 0.0
    %1312 = vmatprep.subr.mxu0 0.0
    %1313 = vmatpush1.msra.mxu0 0.0
    %1314 = vmatprep.subr.mxu0 0.0
    %1315 = vmatpush1.msra.mxu0 0.0
    %1316 = vmatprep.subr.mxu0 0.0
    %1317 = vmatpush1.msra.mxu0 0.0
    %1318 = vmatprep.subr.mxu0 0.0
    %1319 = vmatpush1.msra.mxu0 0.0
    %1320 = vmatprep.subr.mxu0 0.0
    %1321 = vmatpush1.msra.mxu0 0.0
    %1322 = vmatprep.subr.mxu0 0.0
    %1323 = vmatpush1.msra.mxu0 0.0
    %1324 = vmatprep.subr.mxu0 0.0
    %1325 = vmatpush1.msra.mxu0 0.0
    %1326 = vmatprep.mubr.f32.mxu0 0.0
    %1327 = vmatmul.mubr.f32.gmra.mrb[0].mxu0 %v1181
    %v1328 = vpop.f32.mrb[0].mxu0
    %v1329 = vadd.f32 0.0, %v1328
    %v1330 = vpop.f32.mrb[0].mxu0
    %v1331 = vadd.f32 0.0, %v1330
    %1332 = vdwg.mxu0
    %v1333 = vadd.f32 %v1187, %v1258
    %v1334 = vadd.f32 %v1188, %v1260
    %v1335 = vadd.f32 %v1189, %v1329
    %v1336 = vadd.f32 %v1190, %v1331
    %v1337 = vmul.f32 %v1333, 0.5
    %v1338 = vtanh.pop %v1337
    %v1339 = vmul.f32 %v1338, 0.5
    %v1340 = vadd.f32 %v1339, 0.5
    %v1341 = vmul.f32 %v1334, 0.5
    %v1342 = vtanh.pop %v1341
    %v1343 = vmul.f32 %v1342, 0.5
    %v1344 = vadd.f32 %v1343, 0.5
    %v1345 = vtanh.pop %v1335
    %v1346 = vmul.f32 %v1336, 0.5
    %v1347 = vtanh.pop %v1346
    %v1348 = vmul.f32 %v1347, 0.5
    %v1349 = vadd.f32 %v1348, 0.5
    %v1350 = vmul.f32 %v1344, %v1179
    %v1351 = vmul.f32 %v1340, %v1345
    %v1352 = vadd.f32 %v1350, %v1351
    %v1353 = vtanh.pop %v1352
    %v1354 = vmul.f32 %v1349, %v1353
    %s1355 = scalar_lea.vmem [#allocation3], 32
    %1356 = vst [vmem:[%s1355] sm:$0xff] %v1354
    %s1357 = smul.u32 5, 4
    %s1358 = smul.addr %s1357, 8
    %s1359 = scalar_lea.vmem [#allocation2], %s1358
    %v1360 = vld [vmem:[%s1359] sm:$0xff]
    %v1361 = vld [vmem:[%s1359 + $0x8] sm:$0xff]
    %v1362 = vld [vmem:[%s1359 + $0x10] sm:$0xff]
    %v1363 = vld [vmem:[%s1359 + $0x18] sm:$0xff]
    %1364 = vmatprep.subr.mxu0 %v428
    %1365 = vmatpush1.msra.mxu0 %v427
    %1366 = vmatprep.subr.mxu0 %v432
    %1367 = vmatpush1.msra.mxu0 %v431
    %1368 = vmatprep.subr.mxu0 %v436
    %1369 = vmatpush1.msra.mxu0 %v435
    %1370 = vmatprep.subr.mxu0 %v440
    %1371 = vmatpush1.msra.mxu0 %v439
    %1372 = vmatprep.subr.mxu0 %v444
    %1373 = vmatpush1.msra.mxu0 %v443
    %1374 = vmatprep.subr.mxu0 %v448
    %1375 = vmatpush1.msra.mxu0 %v447
    %1376 = vmatprep.subr.mxu0 %v452
    %1377 = vmatpush1.msra.mxu0 %v451
    %1378 = vmatprep.subr.mxu0 %v456
    %1379 = vmatpush1.msra.mxu0 %v455
    %1380 = vmatprep.subr.mxu0 %v460
    %1381 = vmatpush1.msra.mxu0 %v459
    %1382 = vmatprep.subr.mxu0 %v464
    %1383 = vmatpush1.msra.mxu0 %v463
    %1384 = vmatprep.subr.mxu0 %v468
    %1385 = vmatpush1.msra.mxu0 %v467
    %1386 = vmatprep.subr.mxu0 %v472
    %1387 = vmatpush1.msra.mxu0 %v471
    %1388 = vmatprep.subr.mxu0 %v476
    %1389 = vmatpush1.msra.mxu0 %v475
    %1390 = vmatprep.subr.mxu0 %v480
    %1391 = vmatpush1.msra.mxu0 %v479
    %1392 = vmatprep.subr.mxu0 %v484
    %1393 = vmatpush1.msra.mxu0 %v483
    %1394 = vmatprep.subr.mxu0 %v488
    %1395 = vmatpush1.msra.mxu0 %v487
    %1396 = vmatprep.subr.mxu0 0.0
    %1397 = vmatpush1.msra.mxu0 0.0
    %1398 = vmatprep.subr.mxu0 0.0
    %1399 = vmatpush1.msra.mxu0 0.0
    %1400 = vmatprep.subr.mxu0 0.0
    %1401 = vmatpush1.msra.mxu0 0.0
    %1402 = vmatprep.subr.mxu0 0.0
    %1403 = vmatpush1.msra.mxu0 0.0
    %1404 = vmatprep.subr.mxu0 0.0
    %1405 = vmatpush1.msra.mxu0 0.0
    %1406 = vmatprep.subr.mxu0 0.0
    %1407 = vmatpush1.msra.mxu0 0.0
    %1408 = vmatprep.subr.mxu0 0.0
    %1409 = vmatpush1.msra.mxu0 0.0
    %1410 = vmatprep.subr.mxu0 0.0
    %1411 = vmatpush1.msra.mxu0 0.0
    %1412 = vmatprep.subr.mxu0 0.0
    %1413 = vmatpush1.msra.mxu0 0.0
    %1414 = vmatprep.subr.mxu0 0.0
    %1415 = vmatpush1.msra.mxu0 0.0
    %1416 = vmatprep.subr.mxu0 0.0
    %1417 = vmatpush1.msra.mxu0 0.0
    %1418 = vmatprep.subr.mxu0 0.0
    %1419 = vmatpush1.msra.mxu0 0.0
    %1420 = vmatprep.subr.mxu0 0.0
    %1421 = vmatpush1.msra.mxu0 0.0
    %1422 = vmatprep.subr.mxu0 0.0
    %1423 = vmatpush1.msra.mxu0 0.0
    %1424 = vmatprep.subr.mxu0 0.0
    %1425 = vmatpush1.msra.mxu0 0.0
    %1426 = vmatprep.subr.mxu0 0.0
    %1427 = vmatpush1.msra.mxu0 0.0
    %1428 = vmatprep.mubr.f32.mxu0 0.0
    %1429 = vmatmul.mubr.f32.gmra.mrb[0].mxu0 %v1354
    %v1430 = vpop.f32.mrb[0].mxu0
    %v1431 = vadd.f32 0.0, %v1430
    %v1432 = vpop.f32.mrb[0].mxu0
    %v1433 = vadd.f32 0.0, %v1432
    %1434 = vdwg.mxu0
    %1435 = vmatprep.subr.mxu0 %v430
    %1436 = vmatpush1.msra.mxu0 %v429
    %1437 = vmatprep.subr.mxu0 %v434
    %1438 = vmatpush1.msra.mxu0 %v433
    %1439 = vmatprep.subr.mxu0 %v438
    %1440 = vmatpush1.msra.mxu0 %v437
    %1441 = vmatprep.subr.mxu0 %v442
    %1442 = vmatpush1.msra.mxu0 %v441
    %1443 = vmatprep.subr.mxu0 %v446
    %1444 = vmatpush1.msra.mxu0 %v445
    %1445 = vmatprep.subr.mxu0 %v450
    %1446 = vmatpush1.msra.mxu0 %v449
    %1447 = vmatprep.subr.mxu0 %v454
    %1448 = vmatpush1.msra.mxu0 %v453
    %1449 = vmatprep.subr.mxu0 %v458
    %1450 = vmatpush1.msra.mxu0 %v457
    %1451 = vmatprep.subr.mxu0 %v462
    %1452 = vmatpush1.msra.mxu0 %v461
    %1453 = vmatprep.subr.mxu0 %v466
    %1454 = vmatpush1.msra.mxu0 %v465
    %1455 = vmatprep.subr.mxu0 %v470
    %1456 = vmatpush1.msra.mxu0 %v469
    %1457 = vmatprep.subr.mxu0 %v474
    %1458 = vmatpush1.msra.mxu0 %v473
    %1459 = vmatprep.subr.mxu0 %v478
    %1460 = vmatpush1.msra.mxu0 %v477
    %1461 = vmatprep.subr.mxu0 %v482
    %1462 = vmatpush1.msra.mxu0 %v481
    %1463 = vmatprep.subr.mxu0 %v486
    %1464 = vmatpush1.msra.mxu0 %v485
    %1465 = vmatprep.subr.mxu0 %v490
    %1466 = vmatpush1.msra.mxu0 %v489
    %1467 = vmatprep.subr.mxu0 0.0
    %1468 = vmatpush1.msra.mxu0 0.0
    %1469 = vmatprep.subr.mxu0 0.0
    %1470 = vmatpush1.msra.mxu0 0.0
    %1471 = vmatprep.subr.mxu0 0.0
    %1472 = vmatpush1.msra.mxu0 0.0
    %1473 = vmatprep.subr.mxu0 0.0
    %1474 = vmatpush1.msra.mxu0 0.0
    %1475 = vmatprep.subr.mxu0 0.0
    %1476 = vmatpush1.msra.mxu0 0.0
    %1477 = vmatprep.subr.mxu0 0.0
    %1478 = vmatpush1.msra.mxu0 0.0
    %1479 = vmatprep.subr.mxu0 0.0
    %1480 = vmatpush1.msra.mxu0 0.0
    %1481 = vmatprep.subr.mxu0 0.0
    %1482 = vmatpush1.msra.mxu0 0.0
    %1483 = vmatprep.subr.mxu0 0.0
    %1484 = vmatpush1.msra.mxu0 0.0
    %1485 = vmatprep.subr.mxu0 0.0
    %1486 = vmatpush1.msra.mxu0 0.0
    %1487 = vmatprep.subr.mxu0 0.0
    %1488 = vmatpush1.msra.mxu0 0.0
    %1489 = vmatprep.subr.mxu0 0.0
    %1490 = vmatpush1.msra.mxu0 0.0
    %1491 = vmatprep.subr.mxu0 0.0
    %1492 = vmatpush1.msra.mxu0 0.0
    %1493 = vmatprep.subr.mxu0 0.0
    %1494 = vmatpush1.msra.mxu0 0.0
    %1495 = vmatprep.subr.mxu0 0.0
    %1496 = vmatpush1.msra.mxu0 0.0
    %1497 = vmatprep.subr.mxu0 0.0
    %1498 = vmatpush1.msra.mxu0 0.0
    %1499 = vmatprep.mubr.f32.mxu0 0.0
    %1500 = vmatmul.mubr.f32.gmra.mrb[0].mxu0 %v1354
    %v1501 = vpop.f32.mrb[0].mxu0
    %v1502 = vadd.f32 0.0, %v1501
    %v1503 = vpop.f32.mrb[0].mxu0
    %v1504 = vadd.f32 0.0, %v1503
    %1505 = vdwg.mxu0
    %v1506 = vadd.f32 %v1360, %v1431
    %v1507 = vadd.f32 %v1361, %v1433
    %v1508 = vadd.f32 %v1362, %v1502
    %v1509 = vadd.f32 %v1363, %v1504
    %v1510 = vmul.f32 %v1506, 0.5
    %v1511 = vtanh.pop %v1510
    %v1512 = vmul.f32 %v1511, 0.5
    %v1513 = vadd.f32 %v1512, 0.5
    %v1514 = vmul.f32 %v1507, 0.5
    %v1515 = vtanh.pop %v1514
    %v1516 = vmul.f32 %v1515, 0.5
    %v1517 = vadd.f32 %v1516, 0.5
    %v1518 = vtanh.pop %v1508
    %v1519 = vmul.f32 %v1509, 0.5
    %v1520 = vtanh.pop %v1519
    %v1521 = vmul.f32 %v1520, 0.5
    %v1522 = vadd.f32 %v1521, 0.5
    %v1523 = vmul.f32 %v1517, %v1352
    %v1524 = vmul.f32 %v1513, %v1518
    %v1525 = vadd.f32 %v1523, %v1524
    %v1526 = vtanh.pop %v1525
    %v1527 = vmul.f32 %v1522, %v1526
    %s1528 = scalar_lea.vmem [#allocation3], 40
    %1529 = vst [vmem:[%s1528] sm:$0xff] %v1527
    %s1530 = smul.u32 6, 4
    %s1531 = smul.addr %s1530, 8
    %s1532 = scalar_lea.vmem [#allocation2], %s1531
    %v1533 = vld [vmem:[%s1532] sm:$0xff]
    %v1534 = vld [vmem:[%s1532 + $0x8] sm:$0xff]
    %v1535 = vld [vmem:[%s1532 + $0x10] sm:$0xff]
    %v1536 = vld [vmem:[%s1532 + $0x18] sm:$0xff]
    %1537 = vmatprep.subr.mxu0 %v428
    %1538 = vmatpush1.msra.mxu0 %v427
    %1539 = vmatprep.subr.mxu0 %v432
    %1540 = vmatpush1.msra.mxu0 %v431
    %1541 = vmatprep.subr.mxu0 %v436
    %1542 = vmatpush1.msra.mxu0 %v435
    %1543 = vmatprep.subr.mxu0 %v440
    %1544 = vmatpush1.msra.mxu0 %v439
    %1545 = vmatprep.subr.mxu0 %v444
    %1546 = vmatpush1.msra.mxu0 %v443
    %1547 = vmatprep.subr.mxu0 %v448
    %1548 = vmatpush1.msra.mxu0 %v447
    %1549 = vmatprep.subr.mxu0 %v452
    %1550 = vmatpush1.msra.mxu0 %v451
    %1551 = vmatprep.subr.mxu0 %v456
    %1552 = vmatpush1.msra.mxu0 %v455
    %1553 = vmatprep.subr.mxu0 %v460
    %1554 = vmatpush1.msra.mxu0 %v459
    %1555 = vmatprep.subr.mxu0 %v464
    %1556 = vmatpush1.msra.mxu0 %v463
    %1557 = vmatprep.subr.mxu0 %v468
    %1558 = vmatpush1.msra.mxu0 %v467
    %1559 = vmatprep.subr.mxu0 %v472
    %1560 = vmatpush1.msra.mxu0 %v471
    %1561 = vmatprep.subr.mxu0 %v476
    %1562 = vmatpush1.msra.mxu0 %v475
    %1563 = vmatprep.subr.mxu0 %v480
    %1564 = vmatpush1.msra.mxu0 %v479
    %1565 = vmatprep.subr.mxu0 %v484
    %1566 = vmatpush1.msra.mxu0 %v483
    %1567 = vmatprep.subr.mxu0 %v488
    %1568 = vmatpush1.msra.mxu0 %v487
    %1569 = vmatprep.subr.mxu0 0.0
    %1570 = vmatpush1.msra.mxu0 0.0
    %1571 = vmatprep.subr.mxu0 0.0
    %1572 = vmatpush1.msra.mxu0 0.0
    %1573 = vmatprep.subr.mxu0 0.0
    %1574 = vmatpush1.msra.mxu0 0.0
    %1575 = vmatprep.subr.mxu0 0.0
    %1576 = vmatpush1.msra.mxu0 0.0
    %1577 = vmatprep.subr.mxu0 0.0
    %1578 = vmatpush1.msra.mxu0 0.0
    %1579 = vmatprep.subr.mxu0 0.0
    %1580 = vmatpush1.msra.mxu0 0.0
    %1581 = vmatprep.subr.mxu0 0.0
    %1582 = vmatpush1.msra.mxu0 0.0
    %1583 = vmatprep.subr.mxu0 0.0
    %1584 = vmatpush1.msra.mxu0 0.0
    %1585 = vmatprep.subr.mxu0 0.0
    %1586 = vmatpush1.msra.mxu0 0.0
    %1587 = vmatprep.subr.mxu0 0.0
    %1588 = vmatpush1.msra.mxu0 0.0
    %1589 = vmatprep.subr.mxu0 0.0
    %1590 = vmatpush1.msra.mxu0 0.0
    %1591 = vmatprep.subr.mxu0 0.0
    %1592 = vmatpush1.msra.mxu0 0.0
    %1593 = vmatprep.subr.mxu0 0.0
    %1594 = vmatpush1.msra.mxu0 0.0
    %1595 = vmatprep.subr.mxu0 0.0
    %1596 = vmatpush1.msra.mxu0 0.0
    %1597 = vmatprep.subr.mxu0 0.0
    %1598 = vmatpush1.msra.mxu0 0.0
    %1599 = vmatprep.subr.mxu0 0.0
    %1600 = vmatpush1.msra.mxu0 0.0
    %1601 = vmatprep.mubr.f32.mxu0 0.0
    %1602 = vmatmul.mubr.f32.gmra.mrb[0].mxu0 %v1527
    %v1603 = vpop.f32.mrb[0].mxu0
    %v1604 = vadd.f32 0.0, %v1603
    %v1605 = vpop.f32.mrb[0].mxu0
    %v1606 = vadd.f32 0.0, %v1605
    %1607 = vdwg.mxu0
    %1608 = vmatprep.subr.mxu0 %v430
    %1609 = vmatpush1.msra.mxu0 %v429
    %1610 = vmatprep.subr.mxu0 %v434
    %1611 = vmatpush1.msra.mxu0 %v433
    %1612 = vmatprep.subr.mxu0 %v438
    %1613 = vmatpush1.msra.mxu0 %v437
    %1614 = vmatprep.subr.mxu0 %v442
    %1615 = vmatpush1.msra.mxu0 %v441
    %1616 = vmatprep.subr.mxu0 %v446
    %1617 = vmatpush1.msra.mxu0 %v445
    %1618 = vmatprep.subr.mxu0 %v450
    %1619 = vmatpush1.msra.mxu0 %v449
    %1620 = vmatprep.subr.mxu0 %v454
    %1621 = vmatpush1.msra.mxu0 %v453
    %1622 = vmatprep.subr.mxu0 %v458
    %1623 = vmatpush1.msra.mxu0 %v457
    %1624 = vmatprep.subr.mxu0 %v462
    %1625 = vmatpush1.msra.mxu0 %v461
    %1626 = vmatprep.subr.mxu0 %v466
    %1627 = vmatpush1.msra.mxu0 %v465
    %1628 = vmatprep.subr.mxu0 %v470
    %1629 = vmatpush1.msra.mxu0 %v469
    %1630 = vmatprep.subr.mxu0 %v474
    %1631 = vmatpush1.msra.mxu0 %v473
    %1632 = vmatprep.subr.mxu0 %v478
    %1633 = vmatpush1.msra.mxu0 %v477
    %1634 = vmatprep.subr.mxu0 %v482
    %1635 = vmatpush1.msra.mxu0 %v481
    %1636 = vmatprep.subr.mxu0 %v486
    %1637 = vmatpush1.msra.mxu0 %v485
    %1638 = vmatprep.subr.mxu0 %v490
    %1639 = vmatpush1.msra.mxu0 %v489
    %1640 = vmatprep.subr.mxu0 0.0
    %1641 = vmatpush1.msra.mxu0 0.0
    %1642 = vmatprep.subr.mxu0 0.0
    %1643 = vmatpush1.msra.mxu0 0.0
    %1644 = vmatprep.subr.mxu0 0.0
    %1645 = vmatpush1.msra.mxu0 0.0
    %1646 = vmatprep.subr.mxu0 0.0
    %1647 = vmatpush1.msra.mxu0 0.0
    %1648 = vmatprep.subr.mxu0 0.0
    %1649 = vmatpush1.msra.mxu0 0.0
    %1650 = vmatprep.subr.mxu0 0.0
    %1651 = vmatpush1.msra.mxu0 0.0
    %1652 = vmatprep.subr.mxu0 0.0
    %1653 = vmatpush1.msra.mxu0 0.0
    %1654 = vmatprep.subr.mxu0 0.0
    %1655 = vmatpush1.msra.mxu0 0.0
    %1656 = vmatprep.subr.mxu0 0.0
    %1657 = vmatpush1.msra.mxu0 0.0
    %1658 = vmatprep.subr.mxu0 0.0
    %1659 = vmatpush1.msra.mxu0 0.0
    %1660 = vmatprep.subr.mxu0 0.0
    %1661 = vmatpush1.msra.mxu0 0.0
    %1662 = vmatprep.subr.mxu0 0.0
    %1663 = vmatpush1.msra.mxu0 0.0
    %1664 = vmatprep.subr.mxu0 0.0
    %1665 = vmatpush1.msra.mxu0 0.0
    %1666 = vmatprep.subr.mxu0 0.0
    %1667 = vmatpush1.msra.mxu0 0.0
    %1668 = vmatprep.subr.mxu0 0.0
    %1669 = vmatpush1.msra.mxu0 0.0
    %1670 = vmatprep.subr.mxu0 0.0
    %1671 = vmatpush1.msra.mxu0 0.0
    %1672 = vmatprep.mubr.f32.mxu0 0.0
    %1673 = vmatmul.mubr.f32.gmra.mrb[0].mxu0 %v1527
    %v1674 = vpop.f32.mrb[0].mxu0
    %v1675 = vadd.f32 0.0, %v1674
    %v1676 = vpop.f32.mrb[0].mxu0
    %v1677 = vadd.f32 0.0, %v1676
    %1678 = vdwg.mxu0
    %v1679 = vadd.f32 %v1533, %v1604
    %v1680 = vadd.f32 %v1534, %v1606
    %v1681 = vadd.f32 %v1535, %v1675
    %v1682 = vadd.f32 %v1536, %v1677
    %v1683 = vmul.f32 %v1679, 0.5
    %v1684 = vtanh.pop %v1683
    %v1685 = vmul.f32 %v1684, 0.5
    %v1686 = vadd.f32 %v1685, 0.5
    %v1687 = vmul.f32 %v1680, 0.5
    %v1688 = vtanh.pop %v1687
    %v1689 = vmul.f32 %v1688, 0.5
    %v1690 = vadd.f32 %v1689, 0.5
    %v1691 = vtanh.pop %v1681
    %v1692 = vmul.f32 %v1682, 0.5
    %v1693 = vtanh.pop %v1692
    %v1694 = vmul.f32 %v1693, 0.5
    %v1695 = vadd.f32 %v1694, 0.5
    %v1696 = vmul.f32 %v1690, %v1525
    %v1697 = vmul.f32 %v1686, %v1691
    %v1698 = vadd.f32 %v1696, %v1697
    %v1699 = vtanh.pop %v1698
    %v1700 = vmul.f32 %v1695, %v1699
    %s1701 = scalar_lea.vmem [#allocation3], 48
    %1702 = vst [vmem:[%s1701] sm:$0xff] %v1700
    %s1703 = smul.u32 7, 4
    %s1704 = smul.addr %s1703, 8
    %s1705 = scalar_lea.vmem [#allocation2], %s1704
    %v1706 = vld [vmem:[%s1705] sm:$0xff]
    %v1707 = vld [vmem:[%s1705 + $0x8] sm:$0xff]
    %v1708 = vld [vmem:[%s1705 + $0x10] sm:$0xff]
    %v1709 = vld [vmem:[%s1705 + $0x18] sm:$0xff]
    %1710 = vmatprep.subr.mxu0 %v428
    %1711 = vmatpush1.msra.mxu0 %v427
    %1712 = vmatprep.subr.mxu0 %v432
    %1713 = vmatpush1.msra.mxu0 %v431
    %1714 = vmatprep.subr.mxu0 %v436
    %1715 = vmatpush1.msra.mxu0 %v435
    %1716 = vmatprep.subr.mxu0 %v440
    %1717 = vmatpush1.msra.mxu0 %v439
    %1718 = vmatprep.subr.mxu0 %v444
    %1719 = vmatpush1.msra.mxu0 %v443
    %1720 = vmatprep.subr.mxu0 %v448
    %1721 = vmatpush1.msra.mxu0 %v447
    %1722 = vmatprep.subr.mxu0 %v452
    %1723 = vmatpush1.msra.mxu0 %v451
    %1724 = vmatprep.subr.mxu0 %v456
    %1725 = vmatpush1.msra.mxu0 %v455
    %1726 = vmatprep.subr.mxu0 %v460
    %1727 = vmatpush1.msra.mxu0 %v459
    %1728 = vmatprep.subr.mxu0 %v464
    %1729 = vmatpush1.msra.mxu0 %v463
    %1730 = vmatprep.subr.mxu0 %v468
    %1731 = vmatpush1.msra.mxu0 %v467
    %1732 = vmatprep.subr.mxu0 %v472
    %1733 = vmatpush1.msra.mxu0 %v471
    %1734 = vmatprep.subr.mxu0 %v476
    %1735 = vmatpush1.msra.mxu0 %v475
    %1736 = vmatprep.subr.mxu0 %v480
    %1737 = vmatpush1.msra.mxu0 %v479
    %1738 = vmatprep.subr.mxu0 %v484
    %1739 = vmatpush1.msra.mxu0 %v483
    %1740 = vmatprep.subr.mxu0 %v488
    %1741 = vmatpush1.msra.mxu0 %v487
    %1742 = vmatprep.subr.mxu0 0.0
    %1743 = vmatpush1.msra.mxu0 0.0
    %1744 = vmatprep.subr.mxu0 0.0
    %1745 = vmatpush1.msra.mxu0 0.0
    %1746 = vmatprep.subr.mxu0 0.0
    %1747 = vmatpush1.msra.mxu0 0.0
    %1748 = vmatprep.subr.mxu0 0.0
    %1749 = vmatpush1.msra.mxu0 0.0
    %1750 = vmatprep.subr.mxu0 0.0
    %1751 = vmatpush1.msra.mxu0 0.0
    %1752 = vmatprep.subr.mxu0 0.0
    %1753 = vmatpush1.msra.mxu0 0.0
    %1754 = vmatprep.subr.mxu0 0.0
    %1755 = vmatpush1.msra.mxu0 0.0
    %1756 = vmatprep.subr.mxu0 0.0
    %1757 = vmatpush1.msra.mxu0 0.0
    %1758 = vmatprep.subr.mxu0 0.0
    %1759 = vmatpush1.msra.mxu0 0.0
    %1760 = vmatprep.subr.mxu0 0.0
    %1761 = vmatpush1.msra.mxu0 0.0
    %1762 = vmatprep.subr.mxu0 0.0
    %1763 = vmatpush1.msra.mxu0 0.0
    %1764 = vmatprep.subr.mxu0 0.0
    %1765 = vmatpush1.msra.mxu0 0.0
    %1766 = vmatprep.subr.mxu0 0.0
    %1767 = vmatpush1.msra.mxu0 0.0
    %1768 = vmatprep.subr.mxu0 0.0
    %1769 = vmatpush1.msra.mxu0 0.0
    %1770 = vmatprep.subr.mxu0 0.0
    %1771 = vmatpush1.msra.mxu0 0.0
    %1772 = vmatprep.subr.mxu0 0.0
    %1773 = vmatpush1.msra.mxu0 0.0
    %1774 = vmatprep.mubr.f32.mxu0 0.0
    %1775 = vmatmul.mubr.f32.gmra.mrb[0].mxu0 %v1700
    %v1776 = vpop.f32.mrb[0].mxu0
    %v1777 = vadd.f32 0.0, %v1776
    %v1778 = vpop.f32.mrb[0].mxu0
    %v1779 = vadd.f32 0.0, %v1778
    %1780 = vdwg.mxu0
    %1781 = vmatprep.subr.mxu0 %v430
    %1782 = vmatpush1.msra.mxu0 %v429
    %1783 = vmatprep.subr.mxu0 %v434
    %1784 = vmatpush1.msra.mxu0 %v433
    %1785 = vmatprep.subr.mxu0 %v438
    %1786 = vmatpush1.msra.mxu0 %v437
    %1787 = vmatprep.subr.mxu0 %v442
    %1788 = vmatpush1.msra.mxu0 %v441
    %1789 = vmatprep.subr.mxu0 %v446
    %1790 = vmatpush1.msra.mxu0 %v445
    %1791 = vmatprep.subr.mxu0 %v450
    %1792 = vmatpush1.msra.mxu0 %v449
    %1793 = vmatprep.subr.mxu0 %v454
    %1794 = vmatpush1.msra.mxu0 %v453
    %1795 = vmatprep.subr.mxu0 %v458
    %1796 = vmatpush1.msra.mxu0 %v457
    %1797 = vmatprep.subr.mxu0 %v462
    %1798 = vmatpush1.msra.mxu0 %v461
    %1799 = vmatprep.subr.mxu0 %v466
    %1800 = vmatpush1.msra.mxu0 %v465
    %1801 = vmatprep.subr.mxu0 %v470
    %1802 = vmatpush1.msra.mxu0 %v469
    %1803 = vmatprep.subr.mxu0 %v474
    %1804 = vmatpush1.msra.mxu0 %v473
    %1805 = vmatprep.subr.mxu0 %v478
    %1806 = vmatpush1.msra.mxu0 %v477
    %1807 = vmatprep.subr.mxu0 %v482
    %1808 = vmatpush1.msra.mxu0 %v481
    %1809 = vmatprep.subr.mxu0 %v486
    %1810 = vmatpush1.msra.mxu0 %v485
    %1811 = vmatprep.subr.mxu0 %v490
    %1812 = vmatpush1.msra.mxu0 %v489
    %1813 = vmatprep.subr.mxu0 0.0
    %1814 = vmatpush1.msra.mxu0 0.0
    %1815 = vmatprep.subr.mxu0 0.0
    %1816 = vmatpush1.msra.mxu0 0.0
    %1817 = vmatprep.subr.mxu0 0.0
    %1818 = vmatpush1.msra.mxu0 0.0
    %1819 = vmatprep.subr.mxu0 0.0
    %1820 = vmatpush1.msra.mxu0 0.0
    %1821 = vmatprep.subr.mxu0 0.0
    %1822 = vmatpush1.msra.mxu0 0.0
    %1823 = vmatprep.subr.mxu0 0.0
    %1824 = vmatpush1.msra.mxu0 0.0
    %1825 = vmatprep.subr.mxu0 0.0
    %1826 = vmatpush1.msra.mxu0 0.0
    %1827 = vmatprep.subr.mxu0 0.0
    %1828 = vmatpush1.msra.mxu0 0.0
    %1829 = vmatprep.subr.mxu0 0.0
    %1830 = vmatpush1.msra.mxu0 0.0
    %1831 = vmatprep.subr.mxu0 0.0
    %1832 = vmatpush1.msra.mxu0 0.0
    %1833 = vmatprep.subr.mxu0 0.0
    %1834 = vmatpush1.msra.mxu0 0.0
    %1835 = vmatprep.subr.mxu0 0.0
    %1836 = vmatpush1.msra.mxu0 0.0
    %1837 = vmatprep.subr.mxu0 0.0
    %1838 = vmatpush1.msra.mxu0 0.0
    %1839 = vmatprep.subr.mxu0 0.0
    %1840 = vmatpush1.msra.mxu0 0.0
    %1841 = vmatprep.subr.mxu0 0.0
    %1842 = vmatpush1.msra.mxu0 0.0
    %1843 = vmatprep.subr.mxu0 0.0
    %1844 = vmatpush1.msra.mxu0 0.0
    %1845 = vmatprep.mubr.f32.mxu0 0.0
    %1846 = vmatmul.mubr.f32.gmra.mrb[0].mxu0 %v1700
    %v1847 = vpop.f32.mrb[0].mxu0
    %v1848 = vadd.f32 0.0, %v1847
    %v1849 = vpop.f32.mrb[0].mxu0
    %v1850 = vadd.f32 0.0, %v1849
    %1851 = vdwg.mxu0
    %v1852 = vadd.f32 %v1706, %v1777
    %v1853 = vadd.f32 %v1707, %v1779
    %v1854 = vadd.f32 %v1708, %v1848
    %v1855 = vadd.f32 %v1709, %v1850
    %v1856 = vmul.f32 %v1852, 0.5
    %v1857 = vtanh.pop %v1856
    %v1858 = vmul.f32 %v1857, 0.5
    %v1859 = vadd.f32 %v1858, 0.5
    %v1860 = vmul.f32 %v1853, 0.5
    %v1861 = vtanh.pop %v1860
    %v1862 = vmul.f32 %v1861, 0.5
    %v1863 = vadd.f32 %v1862, 0.5
    %v1864 = vtanh.pop %v1854
    %v1865 = vmul.f32 %v1855, 0.5
    %v1866 = vtanh.pop %v1865
    %v1867 = vmul.f32 %v1866, 0.5
    %v1868 = vadd.f32 %v1867, 0.5
    %v1869 = vmul.f32 %v1863, %v1698
    %v1870 = vmul.f32 %v1859, %v1864
    %v1871 = vadd.f32 %v1869, %v1870
    %v1872 = vtanh.pop %v1871
    %v1873 = vmul.f32 %v1868, %v1872
    %s1874 = scalar_lea.vmem [#allocation3], 56
    %1875 = vst [vmem:[%s1874] sm:$0xff] %v1873
    %v1876 = vld [vmem:[#allocation3] sm:$0xff]
    %v1877 = vld [vmem:[#allocation3 + $0x8] sm:$0xff]
    %v1878 = vld [vmem:[#allocation3 + $0x10] sm:$0xff]
    %v1879 = vld [vmem:[#allocation3 + $0x18] sm:$0xff]
    %v1880 = vld [vmem:[#allocation3 + $0x20] sm:$0xff]
    %v1881 = vld [vmem:[#allocation3 + $0x28] sm:$0xff]
    %v1882 = vld [vmem:[#allocation3 + $0x30] sm:$0xff]
    %v1883 = vld [vmem:[#allocation3 + $0x38] sm:$0xff]
    %v1884 = vld [vmem:[#allocation13] sm:$0xff]
    %v1885 = vld [vmem:[#allocation13 + $0x8] sm:$0xff]
    %v1886 = vld [vmem:[#allocation13 + $0x10] sm:$0xff]
    %v1887 = vld [vmem:[#allocation13 + $0x18] sm:$0xff]
    %v1888 = vld [vmem:[#allocation13 + $0x20] sm:$0xff]
    %v1889 = vld [vmem:[#allocation13 + $0x28] sm:$0xff]
    %v1890 = vld [vmem:[#allocation13 + $0x30] sm:$0xff]
    %v1891 = vld [vmem:[#allocation13 + $0x38] sm:$0xff]
    %v1892 = vld [vmem:[#allocation13 + $0x40] sm:$0xff]
    %v1893 = vld [vmem:[#allocation13 + $0x48] sm:$0xff]
    %v1894 = vld [vmem:[#allocation13 + $0x50] sm:$0xff]
    %v1895 = vld [vmem:[#allocation13 + $0x58] sm:$0xff]
    %v1896 = vld [vmem:[#allocation13 + $0x60] sm:$0xff]
    %v1897 = vld [vmem:[#allocation13 + $0x68] sm:$0xff]
    %v1898 = vld [vmem:[#allocation13 + $0x70] sm:$0xff]
    %v1899 = vld [vmem:[#allocation13 + $0x78] sm:$0xff]
    %v1900 = vld [vmem:[%s7] sm:$0x1]
    %v1902 = vlaneseq
    %v1903 = vshrl.u32 %v1902, 7
    %v1904 = vsub.s32 0, %v1903
    %v1905 = vrot.slane %v1900, %v1904
    %1907 = vmatprep.subr.mxu0 0.0
    %1908 = vmatpush1.msra.mxu0 %v1884
    %1909 = vmatprep.subr.mxu0 0.0
    %1910 = vmatpush1.msra.mxu0 %v1885
    %1911 = vmatprep.subr.mxu0 0.0
    %1912 = vmatpush1.msra.mxu0 %v1886
    %1913 = vmatprep.subr.mxu0 0.0
    %1914 = vmatpush1.msra.mxu0 %v1887
    %1915 = vmatprep.subr.mxu0 0.0
    %1916 = vmatpush1.msra.mxu0 %v1888
    %1917 = vmatprep.subr.mxu0 0.0
    %1918 = vmatpush1.msra.mxu0 %v1889
    %1919 = vmatprep.subr.mxu0 0.0
    %1920 = vmatpush1.msra.mxu0 %v1890
    %1921 = vmatprep.subr.mxu0 0.0
    %1922 = vmatpush1.msra.mxu0 %v1891
    %1923 = vmatprep.subr.mxu0 0.0
    %1924 = vmatpush1.msra.mxu0 %v1892
    %1925 = vmatprep.subr.mxu0 0.0
    %1926 = vmatpush1.msra.mxu0 %v1893
    %1927 = vmatprep.subr.mxu0 0.0
    %1928 = vmatpush1.msra.mxu0 %v1894
    %1929 = vmatprep.subr.mxu0 0.0
    %1930 = vmatpush1.msra.mxu0 %v1895
    %1931 = vmatprep.subr.mxu0 0.0
    %1932 = vmatpush1.msra.mxu0 %v1896
    %1933 = vmatprep.subr.mxu0 0.0
    %1934 = vmatpush1.msra.mxu0 %v1897
    %1935 = vmatprep.subr.mxu0 0.0
    %1936 = vmatpush1.msra.mxu0 %v1898
    %1937 = vmatprep.subr.mxu0 0.0
    %1938 = vmatpush1.msra.mxu0 %v1899
    %1939 = vmatprep.subr.mxu0 0.0
    %1940 = vmatpush1.msra.mxu0 0.0
    %1941 = vmatprep.subr.mxu0 0.0
    %1942 = vmatpush1.msra.mxu0 0.0
    %1943 = vmatprep.subr.mxu0 0.0
    %1944 = vmatpush1.msra.mxu0 0.0
    %1945 = vmatprep.subr.mxu0 0.0
    %1946 = vmatpush1.msra.mxu0 0.0
    %1947 = vmatprep.subr.mxu0 0.0
    %1948 = vmatpush1.msra.mxu0 0.0
    %1949 = vmatprep.subr.mxu0 0.0
    %1950 = vmatpush1.msra.mxu0 0.0
    %1951 = vmatprep.subr.mxu0 0.0
    %1952 = vmatpush1.msra.mxu0 0.0
    %1953 = vmatprep.subr.mxu0 0.0
    %1954 = vmatpush1.msra.mxu0 0.0
    %1955 = vmatprep.subr.mxu0 0.0
    %1956 = vmatpush1.msra.mxu0 0.0
    %1957 = vmatprep.subr.mxu0 0.0
    %1958 = vmatpush1.msra.mxu0 0.0
    %1959 = vmatprep.subr.mxu0 0.0
    %1960 = vmatpush1.msra.mxu0 0.0
    %1961 = vmatprep.subr.mxu0 0.0
    %1962 = vmatpush1.msra.mxu0 0.0
    %1963 = vmatprep.subr.mxu0 0.0
    %1964 = vmatpush1.msra.mxu0 0.0
    %1965 = vmatprep.subr.mxu0 0.0
    %1966 = vmatpush1.msra.mxu0 0.0
    %1967 = vmatprep.subr.mxu0 0.0
    %1968 = vmatpush1.msra.mxu0 0.0
    %1969 = vmatprep.subr.mxu0 0.0
    %1970 = vmatpush1.msra.mxu0 0.0
    %1971 = vmatprep.mubr.f32.mxu0 0.0
    %1972 = vmatmul.mubr.f32.gmra.mrb[0].mxu0 %v1876
    %v1973 = vpop.f32.mrb[0].mxu0
    %v1974 = vadd.f32 %v1905, %v1973
    %v1975 = vpop.f32.mrb[0].mxu0
    %1976 = vmatprep.mubr.f32.mxu0 0.0
    %1977 = vmatmul.mubr.f32.gmra.mrb[0].mxu0 %v1877
    %v1978 = vpop.f32.mrb[0].mxu0
    %v1979 = vadd.f32 %v1905, %v1978
    %v1980 = vpop.f32.mrb[0].mxu0
    %1981 = vmatprep.mubr.f32.mxu0 0.0
    %1982 = vmatmul.mubr.f32.gmra.mrb[0].mxu0 %v1878
    %v1983 = vpop.f32.mrb[0].mxu0
    %v1984 = vadd.f32 %v1905, %v1983
    %v1985 = vpop.f32.mrb[0].mxu0
    %1986 = vmatprep.mubr.f32.mxu0 0.0
    %1987 = vmatmul.mubr.f32.gmra.mrb[0].mxu0 %v1879
    %v1988 = vpop.f32.mrb[0].mxu0
    %v1989 = vadd.f32 %v1905, %v1988
    %v1990 = vpop.f32.mrb[0].mxu0
    %1991 = vmatprep.mubr.f32.mxu0 0.0
    %1992 = vmatmul.mubr.f32.gmra.mrb[0].mxu0 %v1880
    %v1993 = vpop.f32.mrb[0].mxu0
    %v1994 = vadd.f32 %v1905, %v1993
    %v1995 = vpop.f32.mrb[0].mxu0
    %1996 = vmatprep.mubr.f32.mxu0 0.0
    %1997 = vmatmul.mubr.f32.gmra.mrb[0].mxu0 %v1881
    %v1998 = vpop.f32.mrb[0].mxu0
    %v1999 = vadd.f32 %v1905, %v1998
    %v2000 = vpop.f32.mrb[0].mxu0
    %2001 = vmatprep.mubr.f32.mxu0 0.0
    %2002 = vmatmul.mubr.f32.gmra.mrb[0].mxu0 %v1882
    %v2003 = vpop.f32.mrb[0].mxu0
    %v2004 = vadd.f32 %v1905, %v2003
    %v2005 = vpop.f32.mrb[0].mxu0
    %2006 = vmatprep.mubr.f32.mxu0 0.0
    %2007 = vmatmul.mubr.f32.gmra.mrb[0].mxu0 %v1883
    %v2008 = vpop.f32.mrb[0].mxu0
    %v2009 = vadd.f32 %v1905, %v2008
    %v2010 = vpop.f32.mrb[0].mxu0
    %2011 = vdwg.mxu0
    %2012 = vst [vmem:[#allocation15] sm:$0xff] %v1974
    %2013 = vst [vmem:[#allocation15 + $0x8] sm:$0xff] %v1979
    %2014 = vst [vmem:[#allocation15 + $0x10] sm:$0xff] %v1984
    %2015 = vst [vmem:[#allocation15 + $0x18] sm:$0xff] %v1989
    %2016 = vst [vmem:[#allocation15 + $0x20] sm:$0xff] %v1994
    %2017 = vst [vmem:[#allocation15 + $0x28] sm:$0xff] %v1999
    %2018 = vst [vmem:[#allocation15 + $0x30] sm:$0xff] %v2004
    %2019 = vst [vmem:[#allocation15 + $0x38] sm:$0xff] %v2009
    %2020 = vst [vmem:[#allocation16] sm:$0xff] %v1873
    %2021 = vst [vmem:[#allocation18] sm:$0xff] %v1871
    // Predicated region
    $region58: #{tpu_custom_call.1} parent=1 // pred_check
      _
    $region59: #{tpu_custom_call.1} parent=1 // pred_check_branch
      %2023 = sbr.rel (0) target = $region61
    $region60: #{tpu_custom_call.1} parent=1 // pred_region
      %s2025 = ssub.s32 1024, 1024
      %2026 = vsyncadd [#allocation6], %s2025
      %s2027 = sshll.u32 [#allocation15], 4
      %s2028 = int_to_ptr.vmem [resolvable:$true] %s2027
      %2033 = dma.vmem_to_hbm [thread:$0]  %s2028, 1024, %s8, [#allocation6], 128, 128, 8
    $region61: #{tpu_custom_call.1} parent=1 // pred_fallthru
      _
    // Predicated region
    $region62: #{tpu_custom_call.1} parent=1 // pred_check
      _
    $region63: #{tpu_custom_call.1} parent=1 // pred_check_branch
      %2035 = sbr.rel (0) target = $region65
    $region64: #{tpu_custom_call.1} parent=1 // pred_region
      %s2037 = ssub.s32 128, 128
      %2038 = vsyncadd [#allocation17], %s2037
      %s2040 = sshll.u32 [#allocation16], 4
      %s2041 = int_to_ptr.vmem [resolvable:$true] %s2040
      %2043 = dma.vmem_to_hbm [thread:$0]  %s2041, 128, %s9, [#allocation17]
    $region65: #{tpu_custom_call.1} parent=1 // pred_fallthru
      _
    // Predicated region
    $region66: #{tpu_custom_call.1} parent=1 // pred_check
      _
    $region67: #{tpu_custom_call.1} parent=1 // pred_check_branch
      %2045 = sbr.rel (0) target = $region69
    $region68: #{tpu_custom_call.1} parent=1 // pred_region
      %s2047 = ssub.s32 128, 128
      %2048 = vsyncadd [#allocation17], %s2047
      %s2050 = sshll.u32 [#allocation18], 4
      %s2051 = int_to_ptr.vmem [resolvable:$true] %s2050
      %2053 = dma.vmem_to_hbm [thread:$0]  %s2051, 128, %s10, [#allocation17]
    $region69: #{tpu_custom_call.1} parent=1 // pred_fallthru
      _
    // Predicated region
    $region70: #{tpu_custom_call.1} parent=1 // pred_check
      _
    $region71: #{tpu_custom_call.1} parent=1 // pred_check_branch
      %2055 = sbr.rel (0) target = $region73
    $region72: #{tpu_custom_call.1} parent=1 // pred_region
      %2056 = dma.done [#allocation6], 1024
    $region73: #{tpu_custom_call.1} parent=1 // pred_fallthru
      _
    // Predicated region
    $region74: #{tpu_custom_call.1} parent=1 // pred_check
      _
    $region75: #{tpu_custom_call.1} parent=1 // pred_check_branch
      %2058 = sbr.rel (0) target = $region77
    $region76: #{tpu_custom_call.1} parent=1 // pred_region
      %2059 = dma.done [#allocation17], 128
    $region77: #{tpu_custom_call.1} parent=1 // pred_fallthru
      _
    // Predicated region
    $region78: #{tpu_custom_call.1} parent=1 // pred_check
      _
    $region79: #{tpu_custom_call.1} parent=1 // pred_check_branch
      %2061 = sbr.rel (0) target = $region81
    $region80: #{tpu_custom_call.1} parent=1 // pred_region
      %2062 = dma.done [#allocation17], 128
    $region81: #{tpu_custom_call.1} parent=1 // pred_fallthru
      _
    %2063 = vsyncpa [#allocation5], 1
    %2064 = vsyncpa [#allocation8], 1
    %2065 = vsyncpa [#allocation11], 1
    %2066 = vsyncpa [#allocation14], 1
    %2067 = vsyncpa [#allocation6], 1
    %2068 = vsyncpa [#allocation17], 1

</llo_original>
